<compile_context>
chip_gen: v7x
topology: tpu7x:2x2x1
jax: 0.10.0
libtpu: 0.0.40
codegen_flags: <defaults>
</compile_context>

<pallas_src>
import functools
import math

import jax
import jax.numpy as jnp
from jax.experimental import pallas as pl
from jax.experimental.pallas import tpu as pltpu

H = 128            # padded hidden size (module default hidden_layers=100)
TN_DEFAULT = 2048  # max batch tile (columns per grid step)

# Packed "small" parameters: one (2H, NS) f32 array of columns.
NS = 16
_C_ADJ0 = 0    # cols 0..3 : fc_adj_in weight columns for raw features 2..5
_C_WIN = 4     # fc_w_in weight column
_C_BIN = 5     # stacked input bias  [fc_w_in.bias ; fc_adj_in.bias]
_C_B1 = 6      # stacked layer1 bias [fc_w1.bias   ; fc_adj1.bias]
_C_B2 = 7      # stacked layer2 bias [fc_w2.bias   ; fc_adj2.bias]
_C_B3 = 8      # fc3.bias
_C_WOUT = 9    # fc_out.weight row as a column
_C_BOUT = 10   # fc_out.bias


def _gbfcn2_kernel(x_ref, *refs, packed):
    f32 = jnp.float32
    bf16 = jnp.bfloat16
    if packed:
        wbd_ref, w3_ref, small_ref, o_ref = refs
    else:
        w6_ref, small_ref, o_ref = refs

    P = small_ref[...]                 # (2H, NS) f32
    xt = x_ref[...].T                  # (7, TN) f32 feature-major (tiny in-kernel transpose)

    def col(c, half=None):
        v = P[:, c:c + 1]              # (2H, 1)
        if half == "w":
            return v[:H]
        if half == "a":
            return v[H:]
        return v

    # ---- input layers on the VPU (exact f32; no K=7 MXU pass) ----------------
    diff = xt[0:1, :] - xt[1:2, :]                                   # (1, TN)
    h_w = jnp.tanh(col(_C_WIN, "w") * diff + col(_C_BIN, "w"))       # (H, TN)
    pre_a = col(_C_BIN, "a")
    # xadj[:, 4] = 0 is folded in: only raw features 2..5 contribute.
    for k in range(4):
        pre_a = pre_a + P[:H, _C_ADJ0 + k:_C_ADJ0 + k + 1] * xt[2 + k:3 + k, :]
    h_a = jnp.maximum(pre_a, 0.0)                                    # (H, TN)

    def hidden_layer(idx, hw, ha, bias_col):
        """tanh-residual on the w half, relu on the adj half (bf16 MXU, f32 acc)."""
        if packed:
            # One block-diagonal (2H,2H) x (2H,TN) pass — fills the 256x256 MXU.
            z = jnp.dot(wbd_ref[idx],
                        jnp.concatenate([hw, ha], axis=0).astype(bf16),
                        preferred_element_type=f32) + bias_col
            zw, za = z[:H], z[H:]
        else:
            # Two 128x128 passes — matches v5e's 4x128^2 MXU arrays.
            zw = jnp.dot(w6_ref[2 * idx], hw.astype(bf16),
                         preferred_element_type=f32) + bias_col[:H]
            za = jnp.dot(w6_ref[2 * idx + 1], ha.astype(bf16),
                         preferred_element_type=f32) + bias_col[H:]
        return jnp.tanh(zw) + hw, jnp.maximum(za, 0.0)

    h_w, h_a = hidden_layer(0, h_w, h_a, col(_C_B1))
    # TODO(synk): dropout is identity in eval mode; not implemented for training.
    h_w, h_a = hidden_layer(1, h_w, h_a, col(_C_B2))

    # ---- fc3 on the concatenated halves --------------------------------------
    if packed:   # single dense K=2H dot
        z3 = jnp.dot(w3_ref[...],
                     jnp.concatenate([h_w, h_a], axis=0).astype(bf16),
                     preferred_element_type=f32)
    else:
        z3 = (jnp.dot(w6_ref[4], h_w.astype(bf16), preferred_element_type=f32)
              + jnp.dot(w6_ref[5], h_a.astype(bf16), preferred_element_type=f32))
    g = jnp.tanh(z3 + col(_C_B3, "w"))                               # (H, TN)

    # ---- fc_out as VPU multiply + cross-sublane reduce -> lane-dense (1, TN) --
    logit = (jnp.sum(g * col(_C_WOUT, "w"), axis=0, keepdims=True)
             + P[0:1, _C_BOUT:_C_BOUT + 1])                          # (1, TN)
    o_ref[...] = jnp.clip(jnp.exp(logit + 1.0) - 4.0 - math.e, -4.0, -1.0)


def _round_up(v, m):
    return -(-v // m) * m


def gbfcn2_forward(x, weights, small, *, packed, tn=None):
    """x: (N, 7) f32 batch-major. Returns (N, 1) f32."""
    N, F = x.shape
    assert F == 7, f"expected (N, 7) input, got {x.shape}"
    if tn is None:
        # Large tiles amortize the ~0.35us per-grid-step overhead; keep the grid
        # length >= 2 whenever N allows so both v7x TensorCores get work.
        tn = max(128, min(TN_DEFAULT, _round_up(-(-N // 2), 128)))
    grid = -(-N // tn)

    if packed:
        wbd, w3p = weights
        w_args = (wbd, w3p)
        w_specs = [pl.BlockSpec(wbd.shape, lambda i: (0, 0, 0)),
                   pl.BlockSpec(w3p.shape, lambda i: (0, 0))]
    else:
        (w6,) = weights
        w_args = (w6,)
        w_specs = [pl.BlockSpec(w6.shape, lambda i: (0, 0, 0))]

    out = pl.pallas_call(
        functools.partial(_gbfcn2_kernel, packed=packed),
        out_shape=jax.ShapeDtypeStruct((1, N), jnp.float32),
        grid=(grid,),
        in_specs=[pl.BlockSpec((tn, 7), lambda i: (i, 0))] + w_specs
        + [pl.BlockSpec(small.shape, lambda i: (0, 0))],
        out_specs=pl.BlockSpec((1, tn), lambda i: (0, i)),    # lane-dense output row
        compiler_params=pltpu.CompilerParams(
            dimension_semantics=("parallel",),
            vmem_limit_bytes=32 * 1024 * 1024),
    )(x.astype(jnp.float32), *w_args, small)
    return out.reshape(N, 1)


def _use_packed_mxu():
    """256-wide block-diag packing fills the v6e/v7x 256x256 MXU; on v5e/v4/v5p
    (128x128 MXU arrays) the zero blocks would waste passes, so keep 128x128."""
    try:
        kind = jax.devices()[0].device_kind.lower()
    except Exception:
        return True
    return not any(t in kind for t in ("v2", "v3", "v4", "v5"))


# ------------------------------ parameter handling ------------------------------

def init_torch_params(key, hidden=100, scale=0.1):
    """PyTorch-layout params: weight (out, in), bias (out,)."""
    layers = [("fc_w_in", 1, hidden), ("fc_w1", hidden, hidden), ("fc_w2", hidden, hidden),
              ("fc_adj_in", 5, hidden), ("fc_adj1", hidden, hidden), ("fc_adj2", hidden, hidden),
              ("fc3", 2 * hidden, hidden), ("fc_out", hidden, 1)]
    keys = jax.random.split(key, len(layers))
    p = {}
    for k, (name, fin, fout) in zip(keys, layers):
        kw, kb = jax.random.split(k)
        p[name + ".weight"] = jax.random.normal(kw, (fout, fin), jnp.float32) * scale
        p[name + ".bias"] = jax.random.normal(kb, (fout,), jnp.float32) * scale
    return p


def pack_params(p, hidden, *, packed):
    """Pack PyTorch-layout params into kernel form (zero-padded to H=128)."""
    assert hidden <= H
    f32 = jnp.float32

    small = jnp.zeros((2 * H, NS), f32)
    adj_in = p["fc_adj_in.weight"]                       # (hidden, 5)
    for k in range(4):
        small = small.at[:hidden, _C_ADJ0 + k].set(adj_in[:, k])
    small = small.at[:hidden, _C_WIN].set(p["fc_w_in.weight"][:, 0])
    small = small.at[:hidden, _C_BIN].set(p["fc_w_in.bias"])
    small = small.at[H:H + hidden, _C_BIN].set(p["fc_adj_in.bias"])
    small = small.at[:hidden, _C_B1].set(p["fc_w1.bias"])
    small = small.at[H:H + hidden, _C_B1].set(p["fc_adj1.bias"])
    small = small.at[:hidden, _C_B2].set(p["fc_w2.bias"])
    small = small.at[H:H + hidden, _C_B2].set(p["fc_adj2.bias"])
    small = small.at[:hidden, _C_B3].set(p["fc3.bias"])
    small = small.at[:hidden, _C_WOUT].set(p["fc_out.weight"][0, :])
    small = small.at[:, _C_BOUT].set(p["fc_out.bias"][0])

    w3 = p["fc3.weight"]                                 # (hidden, 2*hidden)
    if packed:
        def bd(a, b):                                    # block-diagonal (2H, 2H)
            m = jnp.zeros((2 * H, 2 * H), f32)
            m = m.at[:hidden, :hidden].set(a)
            m = m.at[H:H + hidden, H:H + hidden].set(b)
            return m
        wbd = jnp.stack([bd(p["fc_w1.weight"], p["fc_adj1.weight"]),
                         bd(p["fc_w2.weight"], p["fc_adj2.weight"])]).astype(jnp.bfloat16)
        w3p = jnp.zeros((H, 2 * H), f32)
        w3p = w3p.at[:hidden, :hidden].set(w3[:, :hidden])
        w3p = w3p.at[:hidden, H:H + hidden].set(w3[:, hidden:])
        return (wbd, w3p.astype(jnp.bfloat16)), small
    else:
        def pad_hh(w):
            return jnp.zeros((H, H), f32).at[:hidden, :hidden].set(w)
        w6 = jnp.stack([pad_hh(p["fc_w1.weight"]), pad_hh(p["fc_adj1.weight"]),
                        pad_hh(p["fc_w2.weight"]), pad_hh(p["fc_adj2.weight"]),
                        pad_hh(w3[:, :hidden]), pad_hh(w3[:, hidden:])]).astype(jnp.bfloat16)
        return (w6,), small


# ------------------------------ pure-JAX reference ------------------------------

def ref_forward(x, p):
    """Mirrors the PyTorch forward (eval mode), precision-matched to the kernel:
    f32 input/output layers, bf16 (f32-accum) hidden/fc3 matmuls."""
    f32 = jnp.float32
    hi = jax.lax.Precision.HIGHEST

    def mm_bf16(a, w):
        return jnp.dot(a.astype(jnp.bfloat16), w.T.astype(jnp.bfloat16),
                       preferred_element_type=f32)

    xw = (x[:, 0] - x[:, 1])[:, None]
    hw = jnp.tanh(xw * p["fc_w_in.weight"][:, 0][None, :] + p["fc_w_in.bias"][None, :])
    hw = jnp.tanh(mm_bf16(hw, p["fc_w1.weight"]) + p["fc_w1.bias"]) + hw
    hw = jnp.tanh(mm_bf16(hw, p["fc_w2.weight"]) + p["fc_w2.bias"]) + hw
    xadj = x[:, 2:7].at[:, 4].set(0.0)
    ha = jax.nn.relu(jnp.dot(xadj, p["fc_adj_in.weight"].T, precision=hi)
                     + p["fc_adj_in.bias"])
    ha = jax.nn.relu(mm_bf16(ha, p["fc_adj1.weight"]) + p["fc_adj1.bias"])
    ha = jax.nn.relu(mm_bf16(ha, p["fc_adj2.weight"]) + p["fc_adj2.bias"])
    h3 = jnp.tanh(mm_bf16(jnp.concatenate([hw, ha], axis=1), p["fc3.weight"])
                  + p["fc3.bias"])
    logit = jnp.dot(h3, p["fc_out.weight"].T, precision=hi) + p["fc_out.bias"]
    return jnp.clip(jnp.exp(logit + 1.0) - 4.0 - math.e, -4.0, -1.0)


if __name__ == "__main__":
    key = jax.random.PRNGKey(0)
    k_x, k_p = jax.random.split(key)

    hidden = 100     # module default hidden_layers (zero-padded to H=128 in the kernel)
    N = 300          # small batch: tn=256 -> grid of 2 with a partial (masked) last block
    x = jax.random.normal(k_x, (N, 7), jnp.float32)
    params = init_torch_params(k_p, hidden)

    ref = ref_forward(x, params)

    native = _use_packed_mxu()
    for packed in (native, not native):      # validate the MXU-native path and the other one
        weights, small = pack_params(params, hidden, packed=packed)
        out = jax.block_until_ready(gbfcn2_forward(x, weights, small, packed=packed))
        assert out.shape == (N, 1)
        err = float(jnp.max(jnp.abs(out - ref)))
        assert jnp.allclose(out, ref, atol=5e-3, rtol=5e-3), \
            f"packed={packed}: max abs err {err}"
    print("KERNEL_OK")
</pallas_src>

<mosaic_0001>
module attributes {stable_mosaic.version = 11 : i64} {
  func.func @_gbfcn2_kernel(%arg0: i32, %arg1: memref<256x7xf32, #tpu.memory_space<vmem>>, %arg2: memref<2x256x256xbf16, #tpu.memory_space<vmem>>, %arg3: memref<128x256xbf16, #tpu.memory_space<vmem>>, %arg4: memref<256x16xf32, #tpu.memory_space<vmem>>, %arg5: memref<1x256xf32, #tpu.memory_space<vmem>>) attributes {dimension_semantics = [#tpu.dimension_semantics<parallel>], iteration_bounds = array<i64: 2>, scalar_prefetch = 0 : i64, scratch_operands = 0 : i64, tpu.core_type = #tpu.core_type<tc>, window_params = [{transform_indices = @transform_0, window_bounds = array<i64: 256, 7>}, {pipeline_mode = #tpu.pipeline_mode<synchronous>, transform_indices = @transform_1, window_bounds = array<i64: 2, 256, 256>}, {pipeline_mode = #tpu.pipeline_mode<synchronous>, transform_indices = @transform_2, window_bounds = array<i64: 128, 256>}, {pipeline_mode = #tpu.pipeline_mode<synchronous>, transform_indices = @transform_3, window_bounds = array<i64: 256, 16>}, {transform_indices = @transform_4, window_bounds = array<i64: 1, 256>}]} {
    %c0 = arith.constant 0 : index
    %c0_0 = arith.constant 0 : index
    %0 = vector.load %arg4[%c0, %c0_0] : memref<256x16xf32, #tpu.memory_space<vmem>>, vector<256x16xf32>
    %c0_1 = arith.constant 0 : index
    %c0_2 = arith.constant 0 : index
    %1 = vector.load %arg1[%c0_1, %c0_2] : memref<256x7xf32, #tpu.memory_space<vmem>>, vector<256x7xf32>
    %2 = tpu.transpose %1, [1, 0] : vector<256x7xf32> -> vector<7x256xf32>
    %3 = vector.extract_strided_slice %2 {offsets = [0, 0], sizes = [1, 256], strides = [1, 1]} : vector<7x256xf32> to vector<1x256xf32>
    %4 = vector.extract_strided_slice %2 {offsets = [1, 0], sizes = [1, 256], strides = [1, 1]} : vector<7x256xf32> to vector<1x256xf32>
    %5 = arith.subf %3, %4 : vector<1x256xf32>
    %6 = vector.extract_strided_slice %0 {offsets = [0, 4], sizes = [256, 1], strides = [1, 1]} : vector<256x16xf32> to vector<256x1xf32>
    %7 = vector.extract_strided_slice %6 {offsets = [0, 0], sizes = [128, 1], strides = [1, 1]} : vector<256x1xf32> to vector<128x1xf32>
    %8 = vector.broadcast %7 : vector<128x1xf32> to vector<128x256xf32>
    %9 = vector.broadcast %5 : vector<1x256xf32> to vector<128x256xf32>
    %10 = arith.mulf %8, %9 : vector<128x256xf32>
    %11 = vector.extract_strided_slice %0 {offsets = [0, 5], sizes = [256, 1], strides = [1, 1]} : vector<256x16xf32> to vector<256x1xf32>
    %12 = vector.extract_strided_slice %11 {offsets = [0, 0], sizes = [128, 1], strides = [1, 1]} : vector<256x1xf32> to vector<128x1xf32>
    %13 = vector.broadcast %12 : vector<128x1xf32> to vector<128x256xf32>
    %14 = arith.addf %10, %13 : vector<128x256xf32>
    %15 = math.tanh %14 : vector<128x256xf32>
    %16 = vector.extract_strided_slice %0 {offsets = [0, 5], sizes = [256, 1], strides = [1, 1]} : vector<256x16xf32> to vector<256x1xf32>
    %17 = vector.extract_strided_slice %16 {offsets = [128, 0], sizes = [128, 1], strides = [1, 1]} : vector<256x1xf32> to vector<128x1xf32>
    %18 = vector.extract_strided_slice %0 {offsets = [0, 0], sizes = [128, 1], strides = [1, 1]} : vector<256x16xf32> to vector<128x1xf32>
    %19 = vector.extract_strided_slice %2 {offsets = [2, 0], sizes = [1, 256], strides = [1, 1]} : vector<7x256xf32> to vector<1x256xf32>
    %20 = vector.broadcast %18 : vector<128x1xf32> to vector<128x256xf32>
    %21 = vector.broadcast %19 : vector<1x256xf32> to vector<128x256xf32>
    %22 = arith.mulf %20, %21 : vector<128x256xf32>
    %23 = vector.broadcast %17 : vector<128x1xf32> to vector<128x256xf32>
    %24 = arith.addf %23, %22 : vector<128x256xf32>
    %25 = vector.extract_strided_slice %0 {offsets = [0, 1], sizes = [128, 1], strides = [1, 1]} : vector<256x16xf32> to vector<128x1xf32>
    %26 = vector.extract_strided_slice %2 {offsets = [3, 0], sizes = [1, 256], strides = [1, 1]} : vector<7x256xf32> to vector<1x256xf32>
    %27 = vector.broadcast %25 : vector<128x1xf32> to vector<128x256xf32>
    %28 = vector.broadcast %26 : vector<1x256xf32> to vector<128x256xf32>
    %29 = arith.mulf %27, %28 : vector<128x256xf32>
    %30 = arith.addf %24, %29 : vector<128x256xf32>
    %31 = vector.extract_strided_slice %0 {offsets = [0, 2], sizes = [128, 1], strides = [1, 1]} : vector<256x16xf32> to vector<128x1xf32>
    %32 = vector.extract_strided_slice %2 {offsets = [4, 0], sizes = [1, 256], strides = [1, 1]} : vector<7x256xf32> to vector<1x256xf32>
    %33 = vector.broadcast %31 : vector<128x1xf32> to vector<128x256xf32>
    %34 = vector.broadcast %32 : vector<1x256xf32> to vector<128x256xf32>
    %35 = arith.mulf %33, %34 : vector<128x256xf32>
    %36 = arith.addf %30, %35 : vector<128x256xf32>
    %37 = vector.extract_strided_slice %0 {offsets = [0, 3], sizes = [128, 1], strides = [1, 1]} : vector<256x16xf32> to vector<128x1xf32>
    %38 = vector.extract_strided_slice %2 {offsets = [5, 0], sizes = [1, 256], strides = [1, 1]} : vector<7x256xf32> to vector<1x256xf32>
    %39 = vector.broadcast %37 : vector<128x1xf32> to vector<128x256xf32>
    %40 = vector.broadcast %38 : vector<1x256xf32> to vector<128x256xf32>
    %41 = arith.mulf %39, %40 : vector<128x256xf32>
    %42 = arith.addf %36, %41 : vector<128x256xf32>
    %cst = arith.constant 0.000000e+00 : f32
    %43 = vector.broadcast %cst : f32 to vector<128x256xf32>
    %44 = arith.maximumf %42, %43 : vector<128x256xf32>
    %45 = vector.extract_strided_slice %0 {offsets = [0, 6], sizes = [256, 1], strides = [1, 1]} : vector<256x16xf32> to vector<256x1xf32>
    %c0_3 = arith.constant 0 : index
    %c0_4 = arith.constant 0 : index
    %c0_5 = arith.constant 0 : index
    %46 = vector.load %arg2[%c0_3, %c0_4, %c0_5] : memref<2x256x256xbf16, #tpu.memory_space<vmem>>, vector<1x256x256xbf16>
    %47 = vector.shape_cast %46 : vector<1x256x256xbf16> to vector<256x256xbf16>
    %48 = tpu.concatenate %15, %44 in 0 : vector<128x256xf32>, vector<128x256xf32> -> vector<256x256xf32>
    %49 = arith.truncf %48 : vector<256x256xf32> to vector<256x256xbf16>
    %cst_6 = arith.constant dense<0.000000e+00> : vector<256x256xf32>
    %50 = tpu.matmul %47, %49, %cst_6 {dimension_numbers = #tpu.dot_dimension_numbers<[1], [0], [0], [1], [0, 0, 1, 1], [], []>} : vector<256x256xbf16>, vector<256x256xbf16>, vector<256x256xf32> -> vector<256x256xf32>
    %51 = vector.broadcast %45 : vector<256x1xf32> to vector<256x256xf32>
    %52 = arith.addf %50, %51 : vector<256x256xf32>
    %53 = vector.extract_strided_slice %52 {offsets = [0, 0], sizes = [128, 256], strides = [1, 1]} : vector<256x256xf32> to vector<128x256xf32>
    %54 = vector.extract_strided_slice %52 {offsets = [128, 0], sizes = [128, 256], strides = [1, 1]} : vector<256x256xf32> to vector<128x256xf32>
    %55 = math.tanh %53 : vector<128x256xf32>
    %56 = arith.addf %55, %15 : vector<128x256xf32>
    %cst_7 = arith.constant 0.000000e+00 : f32
    %57 = vector.broadcast %cst_7 : f32 to vector<128x256xf32>
    %58 = arith.maximumf %54, %57 : vector<128x256xf32>
    %59 = vector.extract_strided_slice %0 {offsets = [0, 7], sizes = [256, 1], strides = [1, 1]} : vector<256x16xf32> to vector<256x1xf32>
    %c1 = arith.constant 1 : index
    %c0_8 = arith.constant 0 : index
    %c0_9 = arith.constant 0 : index
    %60 = vector.load %arg2[%c1, %c0_8, %c0_9] : memref<2x256x256xbf16, #tpu.memory_space<vmem>>, vector<1x256x256xbf16>
    %61 = vector.shape_cast %60 : vector<1x256x256xbf16> to vector<256x256xbf16>
    %62 = tpu.concatenate %56, %58 in 0 : vector<128x256xf32>, vector<128x256xf32> -> vector<256x256xf32>
    %63 = arith.truncf %62 : vector<256x256xf32> to vector<256x256xbf16>
    %cst_10 = arith.constant dense<0.000000e+00> : vector<256x256xf32>
    %64 = tpu.matmul %61, %63, %cst_10 {dimension_numbers = #tpu.dot_dimension_numbers<[1], [0], [0], [1], [0, 0, 1, 1], [], []>} : vector<256x256xbf16>, vector<256x256xbf16>, vector<256x256xf32> -> vector<256x256xf32>
    %65 = vector.broadcast %59 : vector<256x1xf32> to vector<256x256xf32>
    %66 = arith.addf %64, %65 : vector<256x256xf32>
    %67 = vector.extract_strided_slice %66 {offsets = [0, 0], sizes = [128, 256], strides = [1, 1]} : vector<256x256xf32> to vector<128x256xf32>
    %68 = vector.extract_strided_slice %66 {offsets = [128, 0], sizes = [128, 256], strides = [1, 1]} : vector<256x256xf32> to vector<128x256xf32>
    %69 = math.tanh %67 : vector<128x256xf32>
    %70 = arith.addf %69, %56 : vector<128x256xf32>
    %cst_11 = arith.constant 0.000000e+00 : f32
    %71 = vector.broadcast %cst_11 : f32 to vector<128x256xf32>
    %72 = arith.maximumf %68, %71 : vector<128x256xf32>
    %c0_12 = arith.constant 0 : index
    %c0_13 = arith.constant 0 : index
    %73 = vector.load %arg3[%c0_12, %c0_13] : memref<128x256xbf16, #tpu.memory_space<vmem>>, vector<128x256xbf16>
    %74 = tpu.concatenate %70, %72 in 0 : vector<128x256xf32>, vector<128x256xf32> -> vector<256x256xf32>
    %75 = arith.truncf %74 : vector<256x256xf32> to vector<256x256xbf16>
    %cst_14 = arith.constant dense<0.000000e+00> : vector<128x256xf32>
    %76 = tpu.matmul %73, %75, %cst_14 {dimension_numbers = #tpu.dot_dimension_numbers<[1], [0], [0], [1], [0, 0, 1, 1], [], []>} : vector<128x256xbf16>, vector<256x256xbf16>, vector<128x256xf32> -> vector<128x256xf32>
    %77 = vector.extract_strided_slice %0 {offsets = [0, 8], sizes = [256, 1], strides = [1, 1]} : vector<256x16xf32> to vector<256x1xf32>
    %78 = vector.extract_strided_slice %77 {offsets = [0, 0], sizes = [128, 1], strides = [1, 1]} : vector<256x1xf32> to vector<128x1xf32>
    %79 = vector.broadcast %78 : vector<128x1xf32> to vector<128x256xf32>
    %80 = arith.addf %76, %79 : vector<128x256xf32>
    %81 = math.tanh %80 : vector<128x256xf32>
    %82 = vector.extract_strided_slice %0 {offsets = [0, 9], sizes = [256, 1], strides = [1, 1]} : vector<256x16xf32> to vector<256x1xf32>
    %83 = vector.extract_strided_slice %82 {offsets = [0, 0], sizes = [128, 1], strides = [1, 1]} : vector<256x1xf32> to vector<128x1xf32>
    %84 = vector.broadcast %83 : vector<128x1xf32> to vector<128x256xf32>
    %85 = arith.mulf %81, %84 : vector<128x256xf32>
    %cst_15 = arith.constant dense<0.000000e+00> : vector<256xf32>
    %86 = vector.multi_reduction <add>, %85, %cst_15 [0] : vector<128x256xf32> to vector<256xf32>
    %87 = vector.shape_cast %86 : vector<256xf32> to vector<1x256xf32>
    %88 = vector.extract_strided_slice %0 {offsets = [0, 10], sizes = [1, 1], strides = [1, 1]} : vector<256x16xf32> to vector<1x1xf32>
    %89 = vector.broadcast %88 : vector<1x1xf32> to vector<1x256xf32>
    %90 = arith.addf %87, %89 : vector<1x256xf32>
    %cst_16 = arith.constant 1.000000e+00 : f32
    %91 = vector.broadcast %cst_16 : f32 to vector<1x256xf32>
    %92 = arith.addf %90, %91 : vector<1x256xf32>
    %93 = math.exp %92 : vector<1x256xf32>
    %cst_17 = arith.constant 4.000000e+00 : f32
    %94 = vector.broadcast %cst_17 : f32 to vector<1x256xf32>
    %95 = arith.subf %93, %94 : vector<1x256xf32>
    %cst_18 = arith.constant 2.71828175 : f32
    %96 = vector.broadcast %cst_18 : f32 to vector<1x256xf32>
    %97 = arith.subf %95, %96 : vector<1x256xf32>
    %cst_19 = arith.constant -4.000000e+00 : f32
    %cst_20 = arith.constant -1.000000e+00 : f32
    %98 = vector.broadcast %cst_19 : f32 to vector<1x256xf32>
    %99 = arith.maximumf %98, %97 : vector<1x256xf32>
    %100 = vector.broadcast %cst_20 : f32 to vector<1x256xf32>
    %101 = arith.minimumf %100, %99 : vector<1x256xf32>
    %c0_21 = arith.constant 0 : index
    %c0_22 = arith.constant 0 : index
    %102 = vector.load %arg5[%c0_21, %c0_22] : memref<1x256xf32, #tpu.memory_space<vmem>>, vector<1x256xf32>
    tpu.vector_store %arg5[%c0_21, %c0_22], %101 {strides = array<i32>} : memref<1x256xf32, #tpu.memory_space<vmem>>, vector<1x256xf32>,
    return
  }
  func.func @transform_0(%arg0: i32) -> (i32, i32) {
    %c0_i32 = arith.constant 0 : i32
    %c0_i32_0 = arith.constant 0 : i32
    return %arg0, %c0_i32 : i32, i32
  }
  func.func @transform_1(%arg0: i32) -> (i32, i32, i32) {
    %c0_i32 = arith.constant 0 : i32
    %c0_i32_0 = arith.constant 0 : i32
    %c0_i32_1 = arith.constant 0 : i32
    %c0_i32_2 = arith.constant 0 : i32
    return %c0_i32, %c0_i32_0, %c0_i32_1 : i32, i32, i32
  }
  func.func @transform_2(%arg0: i32) -> (i32, i32) {
    %c0_i32 = arith.constant 0 : i32
    %c0_i32_0 = arith.constant 0 : i32
    %c0_i32_1 = arith.constant 0 : i32
    return %c0_i32, %c0_i32_0 : i32, i32
  }
  func.func @transform_3(%arg0: i32) -> (i32, i32) {
    %c0_i32 = arith.constant 0 : i32
    %c0_i32_0 = arith.constant 0 : i32
    %c0_i32_1 = arith.constant 0 : i32
    return %c0_i32, %c0_i32_0 : i32, i32
  }
  func.func @transform_4(%arg0: i32) -> (i32, i32) {
    %c0_i32 = arith.constant 0 : i32
    %c0_i32_0 = arith.constant 0 : i32
    return %c0_i32, %arg0 : i32, i32
  }
}

</mosaic_0001>

<llo_original>
// kernel: tpu_custom_call.1
$region0: #{tpu_custom_call.1}
  #allocation0 [shape = 'u32[]', space=smem, size = 0x4, offset = 0x4, fixed_abs, tag = 'smem constant byte address 0x4 - core index']
  #allocation1 [shape = 'u32[144,128]{1,0:T(1,128)}', space=vmem, size = 0x12000, scoped, tag = 'internal scratch']
  %s0 = inlined_call_operand.vmem [shape: f32[300,7], index: 0, kind: input, shape index: {}]
  %s1 = inlined_call_operand.vmem [shape: bf16[2,256,256], index: 1, kind: input, shape index: {}]
  %s2 = inlined_call_operand.hbm [shape: bf16[128,256], index: 2, kind: input, shape index: {}]
  %s3 = inlined_call_operand.vmem [shape: f32[256,16], index: 3, kind: input, shape index: {}]
  %s4 = inlined_call_operand.hbm [shape: f32[1,300], index: 4, kind: output, shape index: {}]
  %s5 = sld [smem:[#allocation0]]
  $region53: #{tpu_custom_call.1} parent=0
    _
  %s7 = ssub.s32 1, %s5
  %s8 = scalar_select 0, %s7, %s5
  $region1: #{tpu_custom_call.1} parent=0
    #allocation2 [shape = 'u8[65536]{0}', space=vmem, size = 0x10000, scoped, tag = 'input window, operand 2, single buffered']
    #allocation3 [shape = 's32[2]{0}', space=sflag, size = 0x8, scoped, tag = 'scoped memory for tpu_custom_call.1']
    #allocation4 [shape = 's32[2]{0}', space=sflag, size = 0x8, scoped, tag = 'scoped memory for tpu_custom_call.1']
    #allocation5 [shape = 'u8[2048]{0}', space=vmem, size = 0x800, scoped, tag = 'output window, operand 0']
    %9 = vsyncpa [#allocation3], 0
    %10 = vsyncpa [#allocation4], 0
    %s11 = scalar_lea.sflag [#allocation4], 1
    %12 = vsyncpa %s11, 0
    loop: start=0, step=1, limit=4
    $region2: #{tpu_custom_call.1} parent=1 // loop_pre_header
      _
    $region3: #{tpu_custom_call.1} parent=1 // loop_header
      %s14 = sphi 0, %s18
      %p15 = scmp.ge.s32.totalorder %s14, 4
      %s24 = sphi 0, %s26
      %s27 = sphi 0, %s24
      %s28 = sphi 0, %s27
      %s44 = sphi 0, %s28
      %s48 = sphi 0, %s48
      %s50 = sphi 0, %s48
      %s51 = sphi 0, %s50
      %s65 = sphi 0, %s51
      %s69 = sphi 0, %s69
      %s71 = sphi 0, %s69
      %s72 = sphi 0, %s71
      %s86 = sphi 0, %s72
      %s90 = sphi 0, %s90
      %s92 = sphi 0, %s90
      %s93 = sphi 0, %s92
      %s107 = sphi 0, %s93
      %s113 = sphi 0, %s115
      %s116 = sphi 0, %s113
      %s117 = sphi 0, %s116
      %s133 = sphi 0, %s117
    $region4: #{tpu_custom_call.1} parent=1 // loop_header_branch
      %17 = sbr.rel (%p15) target = $region8
    $region5: #{tpu_custom_call.1} parent=1 // loop_body
      %s19 = ssub.s32 %s14, 1
      %s20 = ssub.s32 %s14, 2
      %s21 = sadd.s32 %s14, 1
      %s22 = ssub.s32 %s14, %s21
      %p23 = scmp.eq.s32.totalorder %s22, 0
      %s25 = sadd.s32 %s24, 1
      %s26 = scalar_select %p23, %s24, %s25
      %p29 = pneg %p23
      %p30 = scmp.eq.s32.totalorder %s14, 1
      %p31 = por %p29, %p30
      %p32 = scmp.ne.s32.totalorder %s24, %s27
      %p33 = scmp.eq.s32.totalorder %s14, 0
      %p34 = por %p32, %p33
      %p35 = scmp.ne.s32.totalorder %s24, %s27
      %p36 = scmp.eq.s32.totalorder %s19, 1
      %p37 = por %p35, %p36
      %p38 = scmp.ne.s32.totalorder %s27, %s28
      %p39 = scmp.eq.s32.totalorder %s19, 0
      %p40 = por %p38, %p39
      %p41 = scmp.ne.s32.totalorder %s27, %s28
      %p42 = scmp.eq.s32.totalorder %s20, 1
      %p43 = por %p41, %p42
      %p45 = scmp.ne.s32.totalorder %s28, %s44
      %p46 = scmp.eq.s32.totalorder %s20, 0
      %p47 = por %p45, %p46
      %s49 = sadd.s32 %s48, 1
      %p52 = scmp.eq.s32.totalorder %s14, 1
      %p53 = scmp.ne.s32.totalorder %s48, %s50
      %p54 = scmp.eq.s32.totalorder %s14, 0
      %p55 = por %p53, %p54
      %p56 = scmp.ne.s32.totalorder %s48, %s50
      %p57 = scmp.eq.s32.totalorder %s19, 1
      %p58 = por %p56, %p57
      %p59 = scmp.ne.s32.totalorder %s50, %s51
      %p60 = scmp.eq.s32.totalorder %s19, 0
      %p61 = por %p59, %p60
      %p62 = scmp.ne.s32.totalorder %s50, %s51
      %p63 = scmp.eq.s32.totalorder %s20, 1
      %p64 = por %p62, %p63
      %p66 = scmp.ne.s32.totalorder %s51, %s65
      %p67 = scmp.eq.s32.totalorder %s20, 0
      %p68 = por %p66, %p67
      %s70 = sadd.s32 %s69, 1
      %p73 = scmp.eq.s32.totalorder %s14, 1
      %p74 = scmp.ne.s32.totalorder %s69, %s71
      %p75 = scmp.eq.s32.totalorder %s14, 0
      %p76 = por %p74, %p75
      %p77 = scmp.ne.s32.totalorder %s69, %s71
      %p78 = scmp.eq.s32.totalorder %s19, 1
      %p79 = por %p77, %p78
      %p80 = scmp.ne.s32.totalorder %s71, %s72
      %p81 = scmp.eq.s32.totalorder %s19, 0
      %p82 = por %p80, %p81
      %p83 = scmp.ne.s32.totalorder %s71, %s72
      %p84 = scmp.eq.s32.totalorder %s20, 1
      %p85 = por %p83, %p84
      %p87 = scmp.ne.s32.totalorder %s72, %s86
      %p88 = scmp.eq.s32.totalorder %s20, 0
      %p89 = por %p87, %p88
      %s91 = sadd.s32 %s90, 1
      %p94 = scmp.eq.s32.totalorder %s14, 1
      %p95 = scmp.ne.s32.totalorder %s90, %s92
      %p96 = scmp.eq.s32.totalorder %s14, 0
      %p97 = por %p95, %p96
      %p98 = scmp.ne.s32.totalorder %s90, %s92
      %p99 = scmp.eq.s32.totalorder %s19, 1
      %p100 = por %p98, %p99
      %p101 = scmp.ne.s32.totalorder %s92, %s93
      %p102 = scmp.eq.s32.totalorder %s19, 0
      %p103 = por %p101, %p102
      %p104 = scmp.ne.s32.totalorder %s92, %s93
      %p105 = scmp.eq.s32.totalorder %s20, 1
      %p106 = por %p104, %p105
      %p108 = scmp.ne.s32.totalorder %s93, %s107
      %p109 = scmp.eq.s32.totalorder %s20, 0
      %p110 = por %p108, %p109
      %s111 = ssub.s32 %s14, %s21
      %p112 = scmp.eq.s32.totalorder %s111, 0
      %s114 = sadd.s32 %s113, 1
      %s115 = scalar_select %p112, %s113, %s114
      %p118 = pneg %p112
      %p119 = scmp.eq.s32.totalorder %s14, 1
      %p120 = por %p118, %p119
      %p121 = scmp.ne.s32.totalorder %s113, %s116
      %p122 = scmp.eq.s32.totalorder %s14, 0
      %p123 = por %p121, %p122
      %p124 = scmp.ne.s32.totalorder %s113, %s116
      %p125 = scmp.eq.s32.totalorder %s19, 1
      %p126 = por %p124, %p125
      %p127 = scmp.ne.s32.totalorder %s116, %s117
      %p128 = scmp.eq.s32.totalorder %s19, 0
      %p129 = por %p127, %p128
      %p130 = scmp.ne.s32.totalorder %s116, %s117
      %p131 = scmp.eq.s32.totalorder %s20, 1
      %p132 = por %p130, %p131
      %p134 = scmp.ne.s32.totalorder %s117, %s133
      %p135 = scmp.eq.s32.totalorder %s20, 0
      %p136 = por %p134, %p135
      %p137 = scmp.le.s32.totalorder 1, %s14
      %p138 = scmp.lt.s32.totalorder %s14, 3
      %p139 = pnand %p137, %p138
      %p140 = pneg %p139
      // Predicated region
      $region9: #{tpu_custom_call.1} parent=5 // pred_check
        _
      $region10: #{tpu_custom_call.1} parent=5 // pred_check_branch
        %142 = sbr.rel (%p139) target = $region12
      $region11: #{tpu_custom_call.1} parent=5 // pred_region
        %s143 = ssub.s32 %s14, 1
        // Predicated region
        $region13: #{tpu_custom_call.1} parent=11 // pred_check
          %p144 = pneg %p61
        $region14: #{tpu_custom_call.1} parent=11 // pred_check_branch
          %146 = sbr.rel (%p144) target = $region16
        $region15: #{tpu_custom_call.1} parent=11 // pred_region
          _
        $region16: #{tpu_custom_call.1} parent=11 // pred_fallthru
          _
        // Predicated region
        $region17: #{tpu_custom_call.1} parent=11 // pred_check
          %p147 = pneg %p82
        $region18: #{tpu_custom_call.1} parent=11 // pred_check_branch
          %149 = sbr.rel (%p147) target = $region20
        $region19: #{tpu_custom_call.1} parent=11 // pred_region
          %s151 = ssub.s32 2048, 2048
          %152 = vsyncadd [#allocation3], %s151
          %s153 = sshll.u32 [#allocation2], 4
          %s154 = int_to_ptr.vmem [resolvable:$true] %s153
          %159 = dma.hbm_to_vmem [thread:$0]  %s2, 2048, %s154, [#allocation3], 128, 128, 8
        $region20: #{tpu_custom_call.1} parent=11 // pred_fallthru
          _
        // Predicated region
        $region21: #{tpu_custom_call.1} parent=11 // pred_check
          %p160 = pneg %p103
        $region22: #{tpu_custom_call.1} parent=11 // pred_check_branch
          %162 = sbr.rel (%p160) target = $region24
        $region23: #{tpu_custom_call.1} parent=11 // pred_region
          _
        $region24: #{tpu_custom_call.1} parent=11 // pred_fallthru
          _
      $region12: #{tpu_custom_call.1} parent=5 // pred_fallthru
        _
      %p163 = scmp.lt.s32.totalorder %s14, 2
      // Predicated region
      $region25: #{tpu_custom_call.1} parent=5 // pred_check
        %p164 = pneg %p163
      $region26: #{tpu_custom_call.1} parent=5 // pred_check_branch
        %166 = sbr.rel (%p164) target = $region28
      $region27: #{tpu_custom_call.1} parent=5 // pred_region
        // Predicated region
        $region29: #{tpu_custom_call.1} parent=27 // pred_check
          %p167 = pneg %p34
        $region30: #{tpu_custom_call.1} parent=27 // pred_check_branch
          %169 = sbr.rel (%p167) target = $region32
        $region31: #{tpu_custom_call.1} parent=27 // pred_region
          %s170 = smul.u32 32, %s14
          %s171 = ssub.s32 38, %s170
          %p172 = scmp.lt.s32.totalorder %s171, 32
          %s173 = scalar_select %p172, %s171, 32
          %s174 = smul.u32 128, %s173
          %p175 = scmp.lt.s32.totalorder %s170, 37
          %s176 = scalar_select %p175, %s170, 37
          %s177 = smul.addr %s176, 8
          %s178 = scalar_lea.vmem %s0, %s177
          %s179 = smul.u32 32, %s14
          %s180 = ssub.s32 38, %s179
          %p181 = scmp.lt.s32.totalorder %s180, 32
          %s182 = scalar_select %p181, %s180, 32
          %s183 = smul.u32 128, %s182
        $region32: #{tpu_custom_call.1} parent=27 // pred_fallthru
          _
      $region28: #{tpu_custom_call.1} parent=5 // pred_fallthru
        _
      %p184 = scmp.le.s32.totalorder 1, %s14
      %p185 = scmp.lt.s32.totalorder %s14, 3
      %p186 = pnand %p184, %p185
      %p187 = pneg %p186
      // Predicated region
      $region33: #{tpu_custom_call.1} parent=5 // pred_check
        _
      $region34: #{tpu_custom_call.1} parent=5 // pred_check_branch
        %189 = sbr.rel (%p186) target = $region36
      $region35: #{tpu_custom_call.1} parent=5 // pred_region
        %s190 = ssub.s32 %s14, 1
        // Predicated region
        $region37: #{tpu_custom_call.1} parent=35 // pred_check
          %p191 = pneg %p82
        $region38: #{tpu_custom_call.1} parent=35 // pred_check_branch
          %193 = sbr.rel (%p191) target = $region40
        $region39: #{tpu_custom_call.1} parent=35 // pred_region
          %194 = dma.done [#allocation3], 2048
        $region40: #{tpu_custom_call.1} parent=35 // pred_fallthru
          _
        %s195 = smul.u32 32, %s19
        %s196 = ssub.s32 38, %s195
        %p197 = scmp.lt.s32.totalorder %s196, 32
        %s198 = scalar_select %p197, %s196, 32
        %s199 = smul.u32 128, %s198
        %p200 = scmp.lt.s32.totalorder %s195, 37
        %s201 = scalar_select %p200, %s195, 37
        %s202 = smul.addr %s201, 8
        %s203 = scalar_lea.vmem %s0, %s202
        %p204 = pneg %p40
        %p205 = pneg %p37
        %p206 = pneg %p61
        %p207 = pneg %p58
        %p208 = pneg %p82
        %p209 = pneg %p79
        %p210 = pneg %p103
        %p211 = pneg %p100
        %p212 = pneg %p129
        %p213 = pneg %p126
        %s214 = sand.u32 %s116, 1
        %s215 = scalar_lea.sflag [#allocation4], %s214
        %s216 = sand.u32 %s116, 1
        %s217 = smul.addr %s216, 2
        %s218 = scalar_lea.vmem [#allocation5], %s217
        %s219 = smul.u32 32, %s19
        %s220 = ssub.s32 38, %s219
        %p221 = scmp.lt.s32.totalorder %s220, 32
        %s222 = scalar_select %p221, %s220, 32
        %s223 = smul.u32 128, %s222
        %p224 = scmp.lt.s32.totalorder %s219, 37
        %s225 = scalar_select %p224, %s219, 37
        %s226 = smul.addr %s225, 8
        %s227 = scalar_lea.vmem %s0, %s226
        %s228 = smul.u32 32, %s19
        %s229 = ssub.s32 38, %s228
        %p230 = scmp.lt.s32.totalorder %s229, 32
        %s231 = scalar_select %p230, %s229, 32
        %s232 = smul.u32 128, %s231
        %s233 = smul.u32 2, %s19
        %s234 = ssub.s32 3, %s233
        %p235 = scmp.lt.s32.totalorder %s234, 2
        %s236 = scalar_select %p235, %s234, 2
        %s237 = smul.u32 16, %s236
        %v238 = vld [vmem:[%s3] sm:$0xff]
        %v239 = vld [vmem:[%s3 + $0x8] sm:$0xff]
        %v240 = vld [vmem:[%s3 + $0x10] sm:$0xff]
        %v241 = vld [vmem:[%s3 + $0x18] sm:$0xff]
        %v242 = vld [vmem:[%s3 + $0x20] sm:$0xff]
        %v243 = vld [vmem:[%s3 + $0x28] sm:$0xff]
        %v244 = vld [vmem:[%s3 + $0x30] sm:$0xff]
        %v245 = vld [vmem:[%s3 + $0x38] sm:$0xff]
        %v246 = vld [vmem:[%s3 + $0x40] sm:$0xff]
        %v247 = vld [vmem:[%s3 + $0x48] sm:$0xff]
        %v248 = vld [vmem:[%s3 + $0x50] sm:$0xff]
        %v249 = vld [vmem:[%s3 + $0x58] sm:$0xff]
        %v250 = vld [vmem:[%s3 + $0x60] sm:$0xff]
        %v251 = vld [vmem:[%s3 + $0x68] sm:$0xff]
        %v252 = vld [vmem:[%s3 + $0x70] sm:$0xff]
        %v253 = vld [vmem:[%s3 + $0x78] sm:$0xff]
        %v254 = vld [vmem:[%s3 + $0x80] sm:$0xff]
        %v255 = vld [vmem:[%s3 + $0x88] sm:$0xff]
        %v256 = vld [vmem:[%s3 + $0x90] sm:$0xff]
        %v257 = vld [vmem:[%s3 + $0x98] sm:$0xff]
        %v258 = vld [vmem:[%s3 + $0xa0] sm:$0xff]
        %v259 = vld [vmem:[%s3 + $0xa8] sm:$0xff]
        %v260 = vld [vmem:[%s3 + $0xb0] sm:$0xff]
        %v261 = vld [vmem:[%s3 + $0xb8] sm:$0xff]
        %v262 = vld [vmem:[%s3 + $0xc0] sm:$0xff]
        %v263 = vld [vmem:[%s3 + $0xc8] sm:$0xff]
        %v264 = vld [vmem:[%s3 + $0xd0] sm:$0xff]
        %v265 = vld [vmem:[%s3 + $0xd8] sm:$0xff]
        %v266 = vld [vmem:[%s3 + $0xe0] sm:$0xff]
        %v267 = vld [vmem:[%s3 + $0xe8] sm:$0xff]
        %v268 = vld [vmem:[%s3 + $0xf0] sm:$0xff]
        %v269 = vld [vmem:[%s3 + $0xf8] sm:$0xff]
        %v270 = vld [vmem:[%s227] sm:$0xff]
        %v271 = vld [vmem:[%s227 + $0x8] sm:$0xff]
        %v272 = vld [vmem:[%s227 + $0x10] sm:$0xff]
        %v273 = vld [vmem:[%s227 + $0x18] sm:$0xff]
        %v274 = vld [vmem:[%s227 + $0x20] sm:$0xff]
        %v275 = vld [vmem:[%s227 + $0x28] sm:$0xff]
        %v276 = vld [vmem:[%s227 + $0x30] sm:$0xff]
        %v277 = vld [vmem:[%s227 + $0x38] sm:$0xff]
        %v278 = vld [vmem:[%s227 + $0x40] sm:$0xff]
        %v279 = vld [vmem:[%s227 + $0x48] sm:$0xff]
        %v280 = vld [vmem:[%s227 + $0x50] sm:$0xff]
        %v281 = vld [vmem:[%s227 + $0x58] sm:$0xff]
        %v282 = vld [vmem:[%s227 + $0x60] sm:$0xff]
        %v283 = vld [vmem:[%s227 + $0x68] sm:$0xff]
        %v284 = vld [vmem:[%s227 + $0x70] sm:$0xff]
        %v285 = vld [vmem:[%s227 + $0x78] sm:$0xff]
        %v286 = vld [vmem:[%s227 + $0x80] sm:$0xff]
        %v287 = vld [vmem:[%s227 + $0x88] sm:$0xff]
        %v288 = vld [vmem:[%s227 + $0x90] sm:$0xff]
        %v289 = vld [vmem:[%s227 + $0x98] sm:$0xff]
        %v290 = vld [vmem:[%s227 + $0xa0] sm:$0xff]
        %v291 = vld [vmem:[%s227 + $0xa8] sm:$0xff]
        %v292 = vld [vmem:[%s227 + $0xb0] sm:$0xff]
        %v293 = vld [vmem:[%s227 + $0xb8] sm:$0xff]
        %v294 = vld [vmem:[%s227 + $0xc0] sm:$0xff]
        %v295 = vld [vmem:[%s227 + $0xc8] sm:$0xff]
        %v296 = vld [vmem:[%s227 + $0xd0] sm:$0xff]
        %v297 = vld [vmem:[%s227 + $0xd8] sm:$0xff]
        %v298 = vld [vmem:[%s227 + $0xe0] sm:$0xff]
        %v299 = vld [vmem:[%s227 + $0xe8] sm:$0xff]
        %v300 = vld [vmem:[%s227 + $0xf0] sm:$0xff]
        %v301 = vld [vmem:[%s227 + $0xf8] sm:$0xff]
        %302 = vxpose.xlu0.b32.start [1/16] %v270, 128
        %303 = vxpose.xlu0.b32.cont [2/16] %v271, 128
        %304 = vxpose.xlu0.b32.cont [3/16] %v272, 128
        %305 = vxpose.xlu0.b32.cont [4/16] %v273, 128
        %306 = vxpose.xlu0.b32.cont [5/16] %v274, 128
        %307 = vxpose.xlu0.b32.cont [6/16] %v275, 128
        %308 = vxpose.xlu0.b32.cont [7/16] %v276, 128
        %309 = vxpose.xlu0.b32.cont [8/16] %v277, 128
        %310 = vxpose.xlu0.b32.cont [9/16] %v278, 128
        %311 = vxpose.xlu0.b32.cont [10/16] %v279, 128
        %312 = vxpose.xlu0.b32.cont [11/16] %v280, 128
        %313 = vxpose.xlu0.b32.cont [12/16] %v281, 128
        %314 = vxpose.xlu0.b32.cont [13/16] %v282, 128
        %315 = vxpose.xlu0.b32.cont [14/16] %v283, 128
        %316 = vxpose.xlu0.b32.cont [15/16] %v284, 128
        %317 = vxpose.xlu0.b32.end [16/16] %v285, 128
        %v318 = vpop.trf.xlu0
        %v319 = vpop.trf.xlu0
        %v320 = vpop.trf.xlu0
        %v321 = vpop.trf.xlu0
        %v322 = vpop.trf.xlu0
        %v323 = vpop.trf.xlu0
        %v324 = vpop.trf.xlu0
        %v325 = vpop.trf.xlu0
        %v326 = vpop.trf.xlu0
        %v327 = vpop.trf.xlu0
        %v328 = vpop.trf.xlu0
        %v329 = vpop.trf.xlu0
        %v330 = vpop.trf.xlu0
        %v331 = vpop.trf.xlu0
        %v332 = vpop.trf.xlu0
        %v333 = vpop.trf.xlu0
        %334 = vxpose.xlu0.b32.start [1/16] %v286, 128
        %335 = vxpose.xlu0.b32.cont [2/16] %v287, 128
        %336 = vxpose.xlu0.b32.cont [3/16] %v288, 128
        %337 = vxpose.xlu0.b32.cont [4/16] %v289, 128
        %338 = vxpose.xlu0.b32.cont [5/16] %v290, 128
        %339 = vxpose.xlu0.b32.cont [6/16] %v291, 128
        %340 = vxpose.xlu0.b32.cont [7/16] %v292, 128
        %341 = vxpose.xlu0.b32.cont [8/16] %v293, 128
        %342 = vxpose.xlu0.b32.cont [9/16] %v294, 128
        %343 = vxpose.xlu0.b32.cont [10/16] %v295, 128
        %344 = vxpose.xlu0.b32.cont [11/16] %v296, 128
        %345 = vxpose.xlu0.b32.cont [12/16] %v297, 128
        %346 = vxpose.xlu0.b32.cont [13/16] %v298, 128
        %347 = vxpose.xlu0.b32.cont [14/16] %v299, 128
        %348 = vxpose.xlu0.b32.cont [15/16] %v300, 128
        %349 = vxpose.xlu0.b32.end [16/16] %v301, 128
        %v350 = vpop.trf.xlu0
        %v351 = vpop.trf.xlu0
        %v352 = vpop.trf.xlu0
        %v353 = vpop.trf.xlu0
        %v354 = vpop.trf.xlu0
        %v355 = vpop.trf.xlu0
        %v356 = vpop.trf.xlu0
        %v357 = vpop.trf.xlu0
        %v358 = vpop.trf.xlu0
        %v359 = vpop.trf.xlu0
        %v360 = vpop.trf.xlu0
        %v361 = vpop.trf.xlu0
        %v362 = vpop.trf.xlu0
        %v363 = vpop.trf.xlu0
        %v364 = vpop.trf.xlu0
        %v365 = vpop.trf.xlu0
        %v368 = vrot.slane %v318, 1
        %v369 = vrot.slane %v350, 1
        %v372 = vsub.f32 %v318, %v368
        %v373 = vsub.f32 %v350, %v369
        %375 = vset.pattern.permute.xlu0 4
        %376 = vperm.xlu0 %375, %v238
        %v377 = vpop.permute.xlu0 %376
        %380 = vset.pattern.permute.xlu0 4
        %381 = vperm.xlu0 %380, %v239
        %v382 = vpop.permute.xlu0 %381
        %385 = vset.pattern.permute.xlu0 4
        %386 = vperm.xlu0 %385, %v240
        %v387 = vpop.permute.xlu0 %386
        %390 = vset.pattern.permute.xlu0 4
        %391 = vperm.xlu0 %390, %v241
        %v392 = vpop.permute.xlu0 %391
        %395 = vset.pattern.permute.xlu0 4
        %396 = vperm.xlu0 %395, %v242
        %v397 = vpop.permute.xlu0 %396
        %400 = vset.pattern.permute.xlu0 4
        %401 = vperm.xlu0 %400, %v243
        %v402 = vpop.permute.xlu0 %401
        %405 = vset.pattern.permute.xlu0 4
        %406 = vperm.xlu0 %405, %v244
        %v407 = vpop.permute.xlu0 %406
        %410 = vset.pattern.permute.xlu0 4
        %411 = vperm.xlu0 %410, %v245
        %v412 = vpop.permute.xlu0 %411
        %415 = vset.pattern.permute.xlu0 4
        %416 = vperm.xlu0 %415, %v246
        %v417 = vpop.permute.xlu0 %416
        %420 = vset.pattern.permute.xlu0 4
        %421 = vperm.xlu0 %420, %v247
        %v422 = vpop.permute.xlu0 %421
        %425 = vset.pattern.permute.xlu0 4
        %426 = vperm.xlu0 %425, %v248
        %v427 = vpop.permute.xlu0 %426
        %430 = vset.pattern.permute.xlu0 4
        %431 = vperm.xlu0 %430, %v249
        %v432 = vpop.permute.xlu0 %431
        %435 = vset.pattern.permute.xlu0 4
        %436 = vperm.xlu0 %435, %v250
        %v437 = vpop.permute.xlu0 %436
        %440 = vset.pattern.permute.xlu0 4
        %441 = vperm.xlu0 %440, %v251
        %v442 = vpop.permute.xlu0 %441
        %445 = vset.pattern.permute.xlu0 4
        %446 = vperm.xlu0 %445, %v252
        %v447 = vpop.permute.xlu0 %446
        %450 = vset.pattern.permute.xlu0 4
        %451 = vperm.xlu0 %450, %v253
        %v452 = vpop.permute.xlu0 %451
        %v454 = vlaneseq
        %v455 = vshrl.u32 %v454, 7
        %v456 = vsub.s32 0, %v455
        %v457 = vrot.slane %v372, %v456
        %v458 = vlaneseq
        %v459 = vshrl.u32 %v458, 7
        %v460 = vsub.s32 0, %v459
        %v461 = vrot.slane %v373, %v460
        %v462 = vmul.f32 %v377, %v457
        %v463 = vmul.f32 %v377, %v461
        %v464 = vmul.f32 %v382, %v457
        %v465 = vmul.f32 %v382, %v461
        %v466 = vmul.f32 %v387, %v457
        %v467 = vmul.f32 %v387, %v461
        %v468 = vmul.f32 %v392, %v457
        %v469 = vmul.f32 %v392, %v461
        %v470 = vmul.f32 %v397, %v457
        %v471 = vmul.f32 %v397, %v461
        %v472 = vmul.f32 %v402, %v457
        %v473 = vmul.f32 %v402, %v461
        %v474 = vmul.f32 %v407, %v457
        %v475 = vmul.f32 %v407, %v461
        %v476 = vmul.f32 %v412, %v457
        %v477 = vmul.f32 %v412, %v461
        %v478 = vmul.f32 %v417, %v457
        %v479 = vmul.f32 %v417, %v461
        %v480 = vmul.f32 %v422, %v457
        %v481 = vmul.f32 %v422, %v461
        %v482 = vmul.f32 %v427, %v457
        %v483 = vmul.f32 %v427, %v461
        %v484 = vmul.f32 %v432, %v457
        %v485 = vmul.f32 %v432, %v461
        %v486 = vmul.f32 %v437, %v457
        %v487 = vmul.f32 %v437, %v461
        %v488 = vmul.f32 %v442, %v457
        %v489 = vmul.f32 %v442, %v461
        %v490 = vmul.f32 %v447, %v457
        %v491 = vmul.f32 %v447, %v461
        %v492 = vmul.f32 %v452, %v457
        %v493 = vmul.f32 %v452, %v461
        %494 = vset.pattern.permute.xlu0 5
        %495 = vperm.xlu0 %494, %v238
        %v496 = vpop.permute.xlu0 %495
        %498 = vset.pattern.permute.xlu0 5
        %499 = vperm.xlu0 %498, %v239
        %v500 = vpop.permute.xlu0 %499
        %502 = vset.pattern.permute.xlu0 5
        %503 = vperm.xlu0 %502, %v240
        %v504 = vpop.permute.xlu0 %503
        %506 = vset.pattern.permute.xlu0 5
        %507 = vperm.xlu0 %506, %v241
        %v508 = vpop.permute.xlu0 %507
        %510 = vset.pattern.permute.xlu0 5
        %511 = vperm.xlu0 %510, %v242
        %v512 = vpop.permute.xlu0 %511
        %514 = vset.pattern.permute.xlu0 5
        %515 = vperm.xlu0 %514, %v243
        %v516 = vpop.permute.xlu0 %515
        %518 = vset.pattern.permute.xlu0 5
        %519 = vperm.xlu0 %518, %v244
        %v520 = vpop.permute.xlu0 %519
        %522 = vset.pattern.permute.xlu0 5
        %523 = vperm.xlu0 %522, %v245
        %v524 = vpop.permute.xlu0 %523
        %526 = vset.pattern.permute.xlu0 5
        %527 = vperm.xlu0 %526, %v246
        %v528 = vpop.permute.xlu0 %527
        %530 = vset.pattern.permute.xlu0 5
        %531 = vperm.xlu0 %530, %v247
        %v532 = vpop.permute.xlu0 %531
        %534 = vset.pattern.permute.xlu0 5
        %535 = vperm.xlu0 %534, %v248
        %v536 = vpop.permute.xlu0 %535
        %538 = vset.pattern.permute.xlu0 5
        %539 = vperm.xlu0 %538, %v249
        %v540 = vpop.permute.xlu0 %539
        %542 = vset.pattern.permute.xlu0 5
        %543 = vperm.xlu0 %542, %v250
        %v544 = vpop.permute.xlu0 %543
        %546 = vset.pattern.permute.xlu0 5
        %547 = vperm.xlu0 %546, %v251
        %v548 = vpop.permute.xlu0 %547
        %550 = vset.pattern.permute.xlu0 5
        %551 = vperm.xlu0 %550, %v252
        %v552 = vpop.permute.xlu0 %551
        %554 = vset.pattern.permute.xlu0 5
        %555 = vperm.xlu0 %554, %v253
        %v556 = vpop.permute.xlu0 %555
        %v558 = vadd.f32 %v462, %v496
        %v559 = vadd.f32 %v463, %v496
        %v560 = vadd.f32 %v464, %v500
        %v561 = vadd.f32 %v465, %v500
        %v562 = vadd.f32 %v466, %v504
        %v563 = vadd.f32 %v467, %v504
        %v564 = vadd.f32 %v468, %v508
        %v565 = vadd.f32 %v469, %v508
        %v566 = vadd.f32 %v470, %v512
        %v567 = vadd.f32 %v471, %v512
        %v568 = vadd.f32 %v472, %v516
        %v569 = vadd.f32 %v473, %v516
        %v570 = vadd.f32 %v474, %v520
        %v571 = vadd.f32 %v475, %v520
        %v572 = vadd.f32 %v476, %v524
        %v573 = vadd.f32 %v477, %v524
        %v574 = vadd.f32 %v478, %v528
        %v575 = vadd.f32 %v479, %v528
        %v576 = vadd.f32 %v480, %v532
        %v577 = vadd.f32 %v481, %v532
        %v578 = vadd.f32 %v482, %v536
        %v579 = vadd.f32 %v483, %v536
        %v580 = vadd.f32 %v484, %v540
        %v581 = vadd.f32 %v485, %v540
        %v582 = vadd.f32 %v486, %v544
        %v583 = vadd.f32 %v487, %v544
        %v584 = vadd.f32 %v488, %v548
        %v585 = vadd.f32 %v489, %v548
        %v586 = vadd.f32 %v490, %v552
        %v587 = vadd.f32 %v491, %v552
        %v588 = vadd.f32 %v492, %v556
        %v589 = vadd.f32 %v493, %v556
        %v590 = vtanh.pop %v558
        %v591 = vtanh.pop %v559
        %v592 = vtanh.pop %v560
        %v593 = vtanh.pop %v561
        %v594 = vtanh.pop %v562
        %v595 = vtanh.pop %v563
        %v596 = vtanh.pop %v564
        %v597 = vtanh.pop %v565
        %v598 = vtanh.pop %v566
        %v599 = vtanh.pop %v567
        %v600 = vtanh.pop %v568
        %v601 = vtanh.pop %v569
        %v602 = vtanh.pop %v570
        %v603 = vtanh.pop %v571
        %v604 = vtanh.pop %v572
        %v605 = vtanh.pop %v573
        %v606 = vtanh.pop %v574
        %v607 = vtanh.pop %v575
        %v608 = vtanh.pop %v576
        %v609 = vtanh.pop %v577
        %v610 = vtanh.pop %v578
        %v611 = vtanh.pop %v579
        %v612 = vtanh.pop %v580
        %v613 = vtanh.pop %v581
        %v614 = vtanh.pop %v582
        %v615 = vtanh.pop %v583
        %v616 = vtanh.pop %v584
        %v617 = vtanh.pop %v585
        %v618 = vtanh.pop %v586
        %v619 = vtanh.pop %v587
        %v620 = vtanh.pop %v588
        %v621 = vtanh.pop %v589
        %622 = vset.pattern.permute.xlu0 0
        %623 = vperm.xlu0 %622, %v238
        %v624 = vpop.permute.xlu0 %623
        %626 = vset.pattern.permute.xlu0 0
        %627 = vperm.xlu0 %626, %v239
        %v628 = vpop.permute.xlu0 %627
        %630 = vset.pattern.permute.xlu0 0
        %631 = vperm.xlu0 %630, %v240
        %v632 = vpop.permute.xlu0 %631
        %634 = vset.pattern.permute.xlu0 0
        %635 = vperm.xlu0 %634, %v241
        %v636 = vpop.permute.xlu0 %635
        %638 = vset.pattern.permute.xlu0 0
        %639 = vperm.xlu0 %638, %v242
        %v640 = vpop.permute.xlu0 %639
        %642 = vset.pattern.permute.xlu0 0
        %643 = vperm.xlu0 %642, %v243
        %v644 = vpop.permute.xlu0 %643
        %646 = vset.pattern.permute.xlu0 0
        %647 = vperm.xlu0 %646, %v244
        %v648 = vpop.permute.xlu0 %647
        %650 = vset.pattern.permute.xlu0 0
        %651 = vperm.xlu0 %650, %v245
        %v652 = vpop.permute.xlu0 %651
        %654 = vset.pattern.permute.xlu0 0
        %655 = vperm.xlu0 %654, %v246
        %v656 = vpop.permute.xlu0 %655
        %658 = vset.pattern.permute.xlu0 0
        %659 = vperm.xlu0 %658, %v247
        %v660 = vpop.permute.xlu0 %659
        %662 = vset.pattern.permute.xlu0 0
        %663 = vperm.xlu0 %662, %v248
        %v664 = vpop.permute.xlu0 %663
        %666 = vset.pattern.permute.xlu0 0
        %667 = vperm.xlu0 %666, %v249
        %v668 = vpop.permute.xlu0 %667
        %670 = vset.pattern.permute.xlu0 0
        %671 = vperm.xlu0 %670, %v250
        %v672 = vpop.permute.xlu0 %671
        %674 = vset.pattern.permute.xlu0 0
        %675 = vperm.xlu0 %674, %v251
        %v676 = vpop.permute.xlu0 %675
        %678 = vset.pattern.permute.xlu0 0
        %679 = vperm.xlu0 %678, %v252
        %v680 = vpop.permute.xlu0 %679
        %682 = vset.pattern.permute.xlu0 0
        %683 = vperm.xlu0 %682, %v253
        %v684 = vpop.permute.xlu0 %683
        %v686 = vlaneseq
        %v687 = vshrl.u32 %v686, 7
        %v688 = vsub.s32 2, %v687
        %v689 = vrot.slane %v318, %v688
        %v690 = vlaneseq
        %v691 = vshrl.u32 %v690, 7
        %v692 = vsub.s32 2, %v691
        %v693 = vrot.slane %v350, %v692
        %v694 = vmul.f32 %v624, %v689
        %v695 = vmul.f32 %v624, %v693
        %v696 = vmul.f32 %v628, %v689
        %v697 = vmul.f32 %v628, %v693
        %v698 = vmul.f32 %v632, %v689
        %v699 = vmul.f32 %v632, %v693
        %v700 = vmul.f32 %v636, %v689
        %v701 = vmul.f32 %v636, %v693
        %v702 = vmul.f32 %v640, %v689
        %v703 = vmul.f32 %v640, %v693
        %v704 = vmul.f32 %v644, %v689
        %v705 = vmul.f32 %v644, %v693
        %v706 = vmul.f32 %v648, %v689
        %v707 = vmul.f32 %v648, %v693
        %v708 = vmul.f32 %v652, %v689
        %v709 = vmul.f32 %v652, %v693
        %v710 = vmul.f32 %v656, %v689
        %v711 = vmul.f32 %v656, %v693
        %v712 = vmul.f32 %v660, %v689
        %v713 = vmul.f32 %v660, %v693
        %v714 = vmul.f32 %v664, %v689
        %v715 = vmul.f32 %v664, %v693
        %v716 = vmul.f32 %v668, %v689
        %v717 = vmul.f32 %v668, %v693
        %v718 = vmul.f32 %v672, %v689
        %v719 = vmul.f32 %v672, %v693
        %v720 = vmul.f32 %v676, %v689
        %v721 = vmul.f32 %v676, %v693
        %v722 = vmul.f32 %v680, %v689
        %v723 = vmul.f32 %v680, %v693
        %v724 = vmul.f32 %v684, %v689
        %v725 = vmul.f32 %v684, %v693
        %727 = vset.pattern.permute.xlu0 5
        %728 = vperm.xlu0 %727, %v254
        %v729 = vpop.permute.xlu0 %728
        %732 = vset.pattern.permute.xlu0 5
        %733 = vperm.xlu0 %732, %v255
        %v734 = vpop.permute.xlu0 %733
        %737 = vset.pattern.permute.xlu0 5
        %738 = vperm.xlu0 %737, %v256
        %v739 = vpop.permute.xlu0 %738
        %742 = vset.pattern.permute.xlu0 5
        %743 = vperm.xlu0 %742, %v257
        %v744 = vpop.permute.xlu0 %743
        %747 = vset.pattern.permute.xlu0 5
        %748 = vperm.xlu0 %747, %v258
        %v749 = vpop.permute.xlu0 %748
        %752 = vset.pattern.permute.xlu0 5
        %753 = vperm.xlu0 %752, %v259
        %v754 = vpop.permute.xlu0 %753
        %757 = vset.pattern.permute.xlu0 5
        %758 = vperm.xlu0 %757, %v260
        %v759 = vpop.permute.xlu0 %758
        %762 = vset.pattern.permute.xlu0 5
        %763 = vperm.xlu0 %762, %v261
        %v764 = vpop.permute.xlu0 %763
        %767 = vset.pattern.permute.xlu0 5
        %768 = vperm.xlu0 %767, %v262
        %v769 = vpop.permute.xlu0 %768
        %772 = vset.pattern.permute.xlu0 5
        %773 = vperm.xlu0 %772, %v263
        %v774 = vpop.permute.xlu0 %773
        %777 = vset.pattern.permute.xlu0 5
        %778 = vperm.xlu0 %777, %v264
        %v779 = vpop.permute.xlu0 %778
        %782 = vset.pattern.permute.xlu0 5
        %783 = vperm.xlu0 %782, %v265
        %v784 = vpop.permute.xlu0 %783
        %787 = vset.pattern.permute.xlu0 5
        %788 = vperm.xlu0 %787, %v266
        %v789 = vpop.permute.xlu0 %788
        %792 = vset.pattern.permute.xlu0 5
        %793 = vperm.xlu0 %792, %v267
        %v794 = vpop.permute.xlu0 %793
        %797 = vset.pattern.permute.xlu0 5
        %798 = vperm.xlu0 %797, %v268
        %v799 = vpop.permute.xlu0 %798
        %802 = vset.pattern.permute.xlu0 5
        %803 = vperm.xlu0 %802, %v269
        %v804 = vpop.permute.xlu0 %803
        %v806 = vadd.f32 %v729, %v694
        %v807 = vadd.f32 %v729, %v695
        %v808 = vadd.f32 %v734, %v696
        %v809 = vadd.f32 %v734, %v697
        %v810 = vadd.f32 %v739, %v698
        %v811 = vadd.f32 %v739, %v699
        %v812 = vadd.f32 %v744, %v700
        %v813 = vadd.f32 %v744, %v701
        %v814 = vadd.f32 %v749, %v702
        %v815 = vadd.f32 %v749, %v703
        %v816 = vadd.f32 %v754, %v704
        %v817 = vadd.f32 %v754, %v705
        %v818 = vadd.f32 %v759, %v706
        %v819 = vadd.f32 %v759, %v707
        %v820 = vadd.f32 %v764, %v708
        %v821 = vadd.f32 %v764, %v709
        %v822 = vadd.f32 %v769, %v710
        %v823 = vadd.f32 %v769, %v711
        %v824 = vadd.f32 %v774, %v712
        %v825 = vadd.f32 %v774, %v713
        %v826 = vadd.f32 %v779, %v714
        %v827 = vadd.f32 %v779, %v715
        %v828 = vadd.f32 %v784, %v716
        %v829 = vadd.f32 %v784, %v717
        %v830 = vadd.f32 %v789, %v718
        %v831 = vadd.f32 %v789, %v719
        %v832 = vadd.f32 %v794, %v720
        %v833 = vadd.f32 %v794, %v721
        %v834 = vadd.f32 %v799, %v722
        %v835 = vadd.f32 %v799, %v723
        %v836 = vadd.f32 %v804, %v724
        %v837 = vadd.f32 %v804, %v725
        %838 = vset.pattern.permute.xlu0 1
        %839 = vperm.xlu0 %838, %v238
        %v840 = vpop.permute.xlu0 %839
        %842 = vset.pattern.permute.xlu0 1
        %843 = vperm.xlu0 %842, %v239
        %v844 = vpop.permute.xlu0 %843
        %846 = vset.pattern.permute.xlu0 1
        %847 = vperm.xlu0 %846, %v240
        %v848 = vpop.permute.xlu0 %847
        %850 = vset.pattern.permute.xlu0 1
        %851 = vperm.xlu0 %850, %v241
        %v852 = vpop.permute.xlu0 %851
        %854 = vset.pattern.permute.xlu0 1
        %855 = vperm.xlu0 %854, %v242
        %v856 = vpop.permute.xlu0 %855
        %858 = vset.pattern.permute.xlu0 1
        %859 = vperm.xlu0 %858, %v243
        %v860 = vpop.permute.xlu0 %859
        %862 = vset.pattern.permute.xlu0 1
        %863 = vperm.xlu0 %862, %v244
        %v864 = vpop.permute.xlu0 %863
        %866 = vset.pattern.permute.xlu0 1
        %867 = vperm.xlu0 %866, %v245
        %v868 = vpop.permute.xlu0 %867
        %870 = vset.pattern.permute.xlu0 1
        %871 = vperm.xlu0 %870, %v246
        %v872 = vpop.permute.xlu0 %871
        %874 = vset.pattern.permute.xlu0 1
        %875 = vperm.xlu0 %874, %v247
        %v876 = vpop.permute.xlu0 %875
        %878 = vset.pattern.permute.xlu0 1
        %879 = vperm.xlu0 %878, %v248
        %v880 = vpop.permute.xlu0 %879
        %882 = vset.pattern.permute.xlu0 1
        %883 = vperm.xlu0 %882, %v249
        %v884 = vpop.permute.xlu0 %883
        %886 = vset.pattern.permute.xlu0 1
        %887 = vperm.xlu0 %886, %v250
        %v888 = vpop.permute.xlu0 %887
        %890 = vset.pattern.permute.xlu0 1
        %891 = vperm.xlu0 %890, %v251
        %v892 = vpop.permute.xlu0 %891
        %894 = vset.pattern.permute.xlu0 1
        %895 = vperm.xlu0 %894, %v252
        %v896 = vpop.permute.xlu0 %895
        %898 = vset.pattern.permute.xlu0 1
        %899 = vperm.xlu0 %898, %v253
        %v900 = vpop.permute.xlu0 %899
        %v902 = vlaneseq
        %v903 = vshrl.u32 %v902, 7
        %v904 = vsub.s32 3, %v903
        %v905 = vrot.slane %v318, %v904
        %v906 = vlaneseq
        %v907 = vshrl.u32 %v906, 7
        %v908 = vsub.s32 3, %v907
        %v909 = vrot.slane %v350, %v908
        %v910 = vmul.f32 %v840, %v905
        %v911 = vmul.f32 %v840, %v909
        %v912 = vmul.f32 %v844, %v905
        %v913 = vmul.f32 %v844, %v909
        %v914 = vmul.f32 %v848, %v905
        %v915 = vmul.f32 %v848, %v909
        %v916 = vmul.f32 %v852, %v905
        %v917 = vmul.f32 %v852, %v909
        %v918 = vmul.f32 %v856, %v905
        %v919 = vmul.f32 %v856, %v909
        %v920 = vmul.f32 %v860, %v905
        %v921 = vmul.f32 %v860, %v909
        %v922 = vmul.f32 %v864, %v905
        %v923 = vmul.f32 %v864, %v909
        %v924 = vmul.f32 %v868, %v905
        %v925 = vmul.f32 %v868, %v909
        %v926 = vmul.f32 %v872, %v905
        %v927 = vmul.f32 %v872, %v909
        %v928 = vmul.f32 %v876, %v905
        %v929 = vmul.f32 %v876, %v909
        %v930 = vmul.f32 %v880, %v905
        %v931 = vmul.f32 %v880, %v909
        %v932 = vmul.f32 %v884, %v905
        %v933 = vmul.f32 %v884, %v909
        %v934 = vmul.f32 %v888, %v905
        %v935 = vmul.f32 %v888, %v909
        %v936 = vmul.f32 %v892, %v905
        %v937 = vmul.f32 %v892, %v909
        %v938 = vmul.f32 %v896, %v905
        %v939 = vmul.f32 %v896, %v909
        %v940 = vmul.f32 %v900, %v905
        %v941 = vmul.f32 %v900, %v909
        %v942 = vadd.f32 %v806, %v910
        %v943 = vadd.f32 %v807, %v911
        %v944 = vadd.f32 %v808, %v912
        %v945 = vadd.f32 %v809, %v913
        %v946 = vadd.f32 %v810, %v914
        %v947 = vadd.f32 %v811, %v915
        %v948 = vadd.f32 %v812, %v916
        %v949 = vadd.f32 %v813, %v917
        %v950 = vadd.f32 %v814, %v918
        %v951 = vadd.f32 %v815, %v919
        %v952 = vadd.f32 %v816, %v920
        %v953 = vadd.f32 %v817, %v921
        %v954 = vadd.f32 %v818, %v922
        %v955 = vadd.f32 %v819, %v923
        %v956 = vadd.f32 %v820, %v924
        %v957 = vadd.f32 %v821, %v925
        %v958 = vadd.f32 %v822, %v926
        %v959 = vadd.f32 %v823, %v927
        %v960 = vadd.f32 %v824, %v928
        %v961 = vadd.f32 %v825, %v929
        %v962 = vadd.f32 %v826, %v930
        %v963 = vadd.f32 %v827, %v931
        %v964 = vadd.f32 %v828, %v932
        %v965 = vadd.f32 %v829, %v933
        %v966 = vadd.f32 %v830, %v934
        %v967 = vadd.f32 %v831, %v935
        %v968 = vadd.f32 %v832, %v936
        %v969 = vadd.f32 %v833, %v937
        %v970 = vadd.f32 %v834, %v938
        %v971 = vadd.f32 %v835, %v939
        %v972 = vadd.f32 %v836, %v940
        %v973 = vadd.f32 %v837, %v941
        %974 = vset.pattern.permute.xlu0 2
        %975 = vperm.xlu0 %974, %v238
        %v976 = vpop.permute.xlu0 %975
        %978 = vset.pattern.permute.xlu0 2
        %979 = vperm.xlu0 %978, %v239
        %v980 = vpop.permute.xlu0 %979
        %982 = vset.pattern.permute.xlu0 2
        %983 = vperm.xlu0 %982, %v240
        %v984 = vpop.permute.xlu0 %983
        %986 = vset.pattern.permute.xlu0 2
        %987 = vperm.xlu0 %986, %v241
        %v988 = vpop.permute.xlu0 %987
        %990 = vset.pattern.permute.xlu0 2
        %991 = vperm.xlu0 %990, %v242
        %v992 = vpop.permute.xlu0 %991
        %994 = vset.pattern.permute.xlu0 2
        %995 = vperm.xlu0 %994, %v243
        %v996 = vpop.permute.xlu0 %995
        %998 = vset.pattern.permute.xlu0 2
        %999 = vperm.xlu0 %998, %v244
        %v1000 = vpop.permute.xlu0 %999
        %1002 = vset.pattern.permute.xlu0 2
        %1003 = vperm.xlu0 %1002, %v245
        %v1004 = vpop.permute.xlu0 %1003
        %1006 = vset.pattern.permute.xlu0 2
        %1007 = vperm.xlu0 %1006, %v246
        %v1008 = vpop.permute.xlu0 %1007
        %1010 = vset.pattern.permute.xlu0 2
        %1011 = vperm.xlu0 %1010, %v247
        %v1012 = vpop.permute.xlu0 %1011
        %1014 = vset.pattern.permute.xlu0 2
        %1015 = vperm.xlu0 %1014, %v248
        %v1016 = vpop.permute.xlu0 %1015
        %1018 = vset.pattern.permute.xlu0 2
        %1019 = vperm.xlu0 %1018, %v249
        %v1020 = vpop.permute.xlu0 %1019
        %1022 = vset.pattern.permute.xlu0 2
        %1023 = vperm.xlu0 %1022, %v250
        %v1024 = vpop.permute.xlu0 %1023
        %1026 = vset.pattern.permute.xlu0 2
        %1027 = vperm.xlu0 %1026, %v251
        %v1028 = vpop.permute.xlu0 %1027
        %1030 = vset.pattern.permute.xlu0 2
        %1031 = vperm.xlu0 %1030, %v252
        %v1032 = vpop.permute.xlu0 %1031
        %1034 = vset.pattern.permute.xlu0 2
        %1035 = vperm.xlu0 %1034, %v253
        %v1036 = vpop.permute.xlu0 %1035
        %v1038 = vlaneseq
        %v1039 = vshrl.u32 %v1038, 7
        %v1040 = vsub.s32 4, %v1039
        %v1041 = vrot.slane %v318, %v1040
        %v1042 = vlaneseq
        %v1043 = vshrl.u32 %v1042, 7
        %v1044 = vsub.s32 4, %v1043
        %v1045 = vrot.slane %v350, %v1044
        %v1046 = vmul.f32 %v976, %v1041
        %v1047 = vmul.f32 %v976, %v1045
        %v1048 = vmul.f32 %v980, %v1041
        %v1049 = vmul.f32 %v980, %v1045
        %v1050 = vmul.f32 %v984, %v1041
        %v1051 = vmul.f32 %v984, %v1045
        %v1052 = vmul.f32 %v988, %v1041
        %v1053 = vmul.f32 %v988, %v1045
        %v1054 = vmul.f32 %v992, %v1041
        %v1055 = vmul.f32 %v992, %v1045
        %v1056 = vmul.f32 %v996, %v1041
        %v1057 = vmul.f32 %v996, %v1045
        %v1058 = vmul.f32 %v1000, %v1041
        %v1059 = vmul.f32 %v1000, %v1045
        %v1060 = vmul.f32 %v1004, %v1041
        %v1061 = vmul.f32 %v1004, %v1045
        %v1062 = vmul.f32 %v1008, %v1041
        %v1063 = vmul.f32 %v1008, %v1045
        %v1064 = vmul.f32 %v1012, %v1041
        %v1065 = vmul.f32 %v1012, %v1045
        %v1066 = vmul.f32 %v1016, %v1041
        %v1067 = vmul.f32 %v1016, %v1045
        %v1068 = vmul.f32 %v1020, %v1041
        %v1069 = vmul.f32 %v1020, %v1045
        %v1070 = vmul.f32 %v1024, %v1041
        %v1071 = vmul.f32 %v1024, %v1045
        %v1072 = vmul.f32 %v1028, %v1041
        %v1073 = vmul.f32 %v1028, %v1045
        %v1074 = vmul.f32 %v1032, %v1041
        %v1075 = vmul.f32 %v1032, %v1045
        %v1076 = vmul.f32 %v1036, %v1041
        %v1077 = vmul.f32 %v1036, %v1045
        %v1078 = vadd.f32 %v942, %v1046
        %v1079 = vadd.f32 %v943, %v1047
        %v1080 = vadd.f32 %v944, %v1048
        %v1081 = vadd.f32 %v945, %v1049
        %v1082 = vadd.f32 %v946, %v1050
        %v1083 = vadd.f32 %v947, %v1051
        %v1084 = vadd.f32 %v948, %v1052
        %v1085 = vadd.f32 %v949, %v1053
        %v1086 = vadd.f32 %v950, %v1054
        %v1087 = vadd.f32 %v951, %v1055
        %v1088 = vadd.f32 %v952, %v1056
        %v1089 = vadd.f32 %v953, %v1057
        %v1090 = vadd.f32 %v954, %v1058
        %v1091 = vadd.f32 %v955, %v1059
        %v1092 = vadd.f32 %v956, %v1060
        %v1093 = vadd.f32 %v957, %v1061
        %v1094 = vadd.f32 %v958, %v1062
        %v1095 = vadd.f32 %v959, %v1063
        %v1096 = vadd.f32 %v960, %v1064
        %v1097 = vadd.f32 %v961, %v1065
        %v1098 = vadd.f32 %v962, %v1066
        %v1099 = vadd.f32 %v963, %v1067
        %v1100 = vadd.f32 %v964, %v1068
        %v1101 = vadd.f32 %v965, %v1069
        %v1102 = vadd.f32 %v966, %v1070
        %v1103 = vadd.f32 %v967, %v1071
        %v1104 = vadd.f32 %v968, %v1072
        %v1105 = vadd.f32 %v969, %v1073
        %v1106 = vadd.f32 %v970, %v1074
        %v1107 = vadd.f32 %v971, %v1075
        %v1108 = vadd.f32 %v972, %v1076
        %v1109 = vadd.f32 %v973, %v1077
        %1110 = vset.pattern.permute.xlu0 3
        %1111 = vperm.xlu0 %1110, %v238
        %v1112 = vpop.permute.xlu0 %1111
        %1114 = vset.pattern.permute.xlu0 3
        %1115 = vperm.xlu0 %1114, %v239
        %v1116 = vpop.permute.xlu0 %1115
        %1118 = vset.pattern.permute.xlu0 3
        %1119 = vperm.xlu0 %1118, %v240
        %v1120 = vpop.permute.xlu0 %1119
        %1122 = vset.pattern.permute.xlu0 3
        %1123 = vperm.xlu0 %1122, %v241
        %v1124 = vpop.permute.xlu0 %1123
        %1126 = vset.pattern.permute.xlu0 3
        %1127 = vperm.xlu0 %1126, %v242
        %v1128 = vpop.permute.xlu0 %1127
        %1130 = vset.pattern.permute.xlu0 3
        %1131 = vperm.xlu0 %1130, %v243
        %v1132 = vpop.permute.xlu0 %1131
        %1134 = vset.pattern.permute.xlu0 3
        %1135 = vperm.xlu0 %1134, %v244
        %v1136 = vpop.permute.xlu0 %1135
        %1138 = vset.pattern.permute.xlu0 3
        %1139 = vperm.xlu0 %1138, %v245
        %v1140 = vpop.permute.xlu0 %1139
        %1142 = vset.pattern.permute.xlu0 3
        %1143 = vperm.xlu0 %1142, %v246
        %v1144 = vpop.permute.xlu0 %1143
        %1146 = vset.pattern.permute.xlu0 3
        %1147 = vperm.xlu0 %1146, %v247
        %v1148 = vpop.permute.xlu0 %1147
        %1150 = vset.pattern.permute.xlu0 3
        %1151 = vperm.xlu0 %1150, %v248
        %v1152 = vpop.permute.xlu0 %1151
        %1154 = vset.pattern.permute.xlu0 3
        %1155 = vperm.xlu0 %1154, %v249
        %v1156 = vpop.permute.xlu0 %1155
        %1158 = vset.pattern.permute.xlu0 3
        %1159 = vperm.xlu0 %1158, %v250
        %v1160 = vpop.permute.xlu0 %1159
        %1162 = vset.pattern.permute.xlu0 3
        %1163 = vperm.xlu0 %1162, %v251
        %v1164 = vpop.permute.xlu0 %1163
        %1166 = vset.pattern.permute.xlu0 3
        %1167 = vperm.xlu0 %1166, %v252
        %v1168 = vpop.permute.xlu0 %1167
        %1170 = vset.pattern.permute.xlu0 3
        %1171 = vperm.xlu0 %1170, %v253
        %v1172 = vpop.permute.xlu0 %1171
        %v1174 = vlaneseq
        %v1175 = vshrl.u32 %v1174, 7
        %v1176 = vsub.s32 5, %v1175
        %v1177 = vrot.slane %v318, %v1176
        %v1178 = vlaneseq
        %v1179 = vshrl.u32 %v1178, 7
        %v1180 = vsub.s32 5, %v1179
        %v1181 = vrot.slane %v350, %v1180
        %v1182 = vmul.f32 %v1112, %v1177
        %v1183 = vmul.f32 %v1112, %v1181
        %v1184 = vmul.f32 %v1116, %v1177
        %v1185 = vmul.f32 %v1116, %v1181
        %v1186 = vmul.f32 %v1120, %v1177
        %v1187 = vmul.f32 %v1120, %v1181
        %v1188 = vmul.f32 %v1124, %v1177
        %v1189 = vmul.f32 %v1124, %v1181
        %v1190 = vmul.f32 %v1128, %v1177
        %v1191 = vmul.f32 %v1128, %v1181
        %v1192 = vmul.f32 %v1132, %v1177
        %v1193 = vmul.f32 %v1132, %v1181
        %v1194 = vmul.f32 %v1136, %v1177
        %v1195 = vmul.f32 %v1136, %v1181
        %v1196 = vmul.f32 %v1140, %v1177
        %v1197 = vmul.f32 %v1140, %v1181
        %v1198 = vmul.f32 %v1144, %v1177
        %v1199 = vmul.f32 %v1144, %v1181
        %v1200 = vmul.f32 %v1148, %v1177
        %v1201 = vmul.f32 %v1148, %v1181
        %v1202 = vmul.f32 %v1152, %v1177
        %v1203 = vmul.f32 %v1152, %v1181
        %v1204 = vmul.f32 %v1156, %v1177
        %v1205 = vmul.f32 %v1156, %v1181
        %v1206 = vmul.f32 %v1160, %v1177
        %v1207 = vmul.f32 %v1160, %v1181
        %v1208 = vmul.f32 %v1164, %v1177
        %v1209 = vmul.f32 %v1164, %v1181
        %v1210 = vmul.f32 %v1168, %v1177
        %v1211 = vmul.f32 %v1168, %v1181
        %v1212 = vmul.f32 %v1172, %v1177
        %v1213 = vmul.f32 %v1172, %v1181
        %v1214 = vadd.f32 %v1078, %v1182
        %v1215 = vadd.f32 %v1079, %v1183
        %v1216 = vadd.f32 %v1080, %v1184
        %v1217 = vadd.f32 %v1081, %v1185
        %v1218 = vadd.f32 %v1082, %v1186
        %v1219 = vadd.f32 %v1083, %v1187
        %v1220 = vadd.f32 %v1084, %v1188
        %v1221 = vadd.f32 %v1085, %v1189
        %v1222 = vadd.f32 %v1086, %v1190
        %v1223 = vadd.f32 %v1087, %v1191
        %v1224 = vadd.f32 %v1088, %v1192
        %v1225 = vadd.f32 %v1089, %v1193
        %v1226 = vadd.f32 %v1090, %v1194
        %v1227 = vadd.f32 %v1091, %v1195
        %v1228 = vadd.f32 %v1092, %v1196
        %v1229 = vadd.f32 %v1093, %v1197
        %v1230 = vadd.f32 %v1094, %v1198
        %v1231 = vadd.f32 %v1095, %v1199
        %v1232 = vadd.f32 %v1096, %v1200
        %v1233 = vadd.f32 %v1097, %v1201
        %v1234 = vadd.f32 %v1098, %v1202
        %v1235 = vadd.f32 %v1099, %v1203
        %v1236 = vadd.f32 %v1100, %v1204
        %v1237 = vadd.f32 %v1101, %v1205
        %v1238 = vadd.f32 %v1102, %v1206
        %v1239 = vadd.f32 %v1103, %v1207
        %v1240 = vadd.f32 %v1104, %v1208
        %v1241 = vadd.f32 %v1105, %v1209
        %v1242 = vadd.f32 %v1106, %v1210
        %v1243 = vadd.f32 %v1107, %v1211
        %v1244 = vadd.f32 %v1108, %v1212
        %v1245 = vadd.f32 %v1109, %v1213
        %v1246 = vmax.f32 %v1214, 0.0
        %v1247 = vmax.f32 %v1215, 0.0
        %v1248 = vmax.f32 %v1216, 0.0
        %v1249 = vmax.f32 %v1217, 0.0
        %v1250 = vmax.f32 %v1218, 0.0
        %v1251 = vmax.f32 %v1219, 0.0
        %v1252 = vmax.f32 %v1220, 0.0
        %v1253 = vmax.f32 %v1221, 0.0
        %v1254 = vmax.f32 %v1222, 0.0
        %v1255 = vmax.f32 %v1223, 0.0
        %v1256 = vmax.f32 %v1224, 0.0
        %v1257 = vmax.f32 %v1225, 0.0
        %v1258 = vmax.f32 %v1226, 0.0
        %v1259 = vmax.f32 %v1227, 0.0
        %v1260 = vmax.f32 %v1228, 0.0
        %v1261 = vmax.f32 %v1229, 0.0
        %v1262 = vmax.f32 %v1230, 0.0
        %v1263 = vmax.f32 %v1231, 0.0
        %v1264 = vmax.f32 %v1232, 0.0
        %v1265 = vmax.f32 %v1233, 0.0
        %v1266 = vmax.f32 %v1234, 0.0
        %v1267 = vmax.f32 %v1235, 0.0
        %v1268 = vmax.f32 %v1236, 0.0
        %v1269 = vmax.f32 %v1237, 0.0
        %v1270 = vmax.f32 %v1238, 0.0
        %v1271 = vmax.f32 %v1239, 0.0
        %v1272 = vmax.f32 %v1240, 0.0
        %v1273 = vmax.f32 %v1241, 0.0
        %v1274 = vmax.f32 %v1242, 0.0
        %v1275 = vmax.f32 %v1243, 0.0
        %v1276 = vmax.f32 %v1244, 0.0
        %v1277 = vmax.f32 %v1245, 0.0
        %v1278 = vld [vmem:[%s1] sm:$0xff]
        %v1279 = vld [vmem:[%s1 + $0x8] sm:$0xff]
        %v1280 = vld [vmem:[%s1 + $0x10] sm:$0xff]
        %v1281 = vld [vmem:[%s1 + $0x18] sm:$0xff]
        %v1282 = vld [vmem:[%s1 + $0x20] sm:$0xff]
        %v1283 = vld [vmem:[%s1 + $0x28] sm:$0xff]
        %v1284 = vld [vmem:[%s1 + $0x30] sm:$0xff]
        %v1285 = vld [vmem:[%s1 + $0x38] sm:$0xff]
        %v1286 = vld [vmem:[%s1 + $0x40] sm:$0xff]
        %v1287 = vld [vmem:[%s1 + $0x48] sm:$0xff]
        %v1288 = vld [vmem:[%s1 + $0x50] sm:$0xff]
        %v1289 = vld [vmem:[%s1 + $0x58] sm:$0xff]
        %v1290 = vld [vmem:[%s1 + $0x60] sm:$0xff]
        %v1291 = vld [vmem:[%s1 + $0x68] sm:$0xff]
        %v1292 = vld [vmem:[%s1 + $0x70] sm:$0xff]
        %v1293 = vld [vmem:[%s1 + $0x78] sm:$0xff]
        %v1294 = vld [vmem:[%s1 + $0x80] sm:$0xff]
        %v1295 = vld [vmem:[%s1 + $0x88] sm:$0xff]
        %v1296 = vld [vmem:[%s1 + $0x90] sm:$0xff]
        %v1297 = vld [vmem:[%s1 + $0x98] sm:$0xff]
        %v1298 = vld [vmem:[%s1 + $0xa0] sm:$0xff]
        %v1299 = vld [vmem:[%s1 + $0xa8] sm:$0xff]
        %v1300 = vld [vmem:[%s1 + $0xb0] sm:$0xff]
        %v1301 = vld [vmem:[%s1 + $0xb8] sm:$0xff]
        %v1302 = vld [vmem:[%s1 + $0xc0] sm:$0xff]
        %v1303 = vld [vmem:[%s1 + $0xc8] sm:$0xff]
        %v1304 = vld [vmem:[%s1 + $0xd0] sm:$0xff]
        %v1305 = vld [vmem:[%s1 + $0xd8] sm:$0xff]
        %v1306 = vld [vmem:[%s1 + $0xe0] sm:$0xff]
        %v1307 = vld [vmem:[%s1 + $0xe8] sm:$0xff]
        %v1308 = vld [vmem:[%s1 + $0xf0] sm:$0xff]
        %v1309 = vld [vmem:[%s1 + $0xf8] sm:$0xff]
        %v1310 = vpack.c.bf16 %v592, %v590
        %v1311 = vpack.c.bf16 %v593, %v591
        %v1312 = vpack.c.bf16 %v596, %v594
        %v1313 = vpack.c.bf16 %v597, %v595
        %v1314 = vpack.c.bf16 %v600, %v598
        %v1315 = vpack.c.bf16 %v601, %v599
        %v1316 = vpack.c.bf16 %v604, %v602
        %v1317 = vpack.c.bf16 %v605, %v603
        %v1318 = vpack.c.bf16 %v608, %v606
        %v1319 = vpack.c.bf16 %v609, %v607
        %v1320 = vpack.c.bf16 %v612, %v610
        %v1321 = vpack.c.bf16 %v613, %v611
        %v1322 = vpack.c.bf16 %v616, %v614
        %v1323 = vpack.c.bf16 %v617, %v615
        %v1324 = vpack.c.bf16 %v620, %v618
        %v1325 = vpack.c.bf16 %v621, %v619
        %v1326 = vpack.c.bf16 %v1248, %v1246
        %v1327 = vpack.c.bf16 %v1249, %v1247
        %v1328 = vpack.c.bf16 %v1252, %v1250
        %v1329 = vpack.c.bf16 %v1253, %v1251
        %v1330 = vpack.c.bf16 %v1256, %v1254
        %v1331 = vpack.c.bf16 %v1257, %v1255
        %v1332 = vpack.c.bf16 %v1260, %v1258
        %v1333 = vpack.c.bf16 %v1261, %v1259
        %v1334 = vpack.c.bf16 %v1264, %v1262
        %v1335 = vpack.c.bf16 %v1265, %v1263
        %v1336 = vpack.c.bf16 %v1268, %v1266
        %v1337 = vpack.c.bf16 %v1269, %v1267
        %v1338 = vpack.c.bf16 %v1272, %v1270
        %v1339 = vpack.c.bf16 %v1273, %v1271
        %v1340 = vpack.c.bf16 %v1276, %v1274
        %v1341 = vpack.c.bf16 %v1277, %v1275
        %1342 = vset.pattern.permute.xlu0 6
        %1343 = vperm.xlu0 %1342, %v238
        %v1344 = vpop.permute.xlu0 %1343
        %1346 = vset.pattern.permute.xlu0 6
        %1347 = vperm.xlu0 %1346, %v239
        %v1348 = vpop.permute.xlu0 %1347
        %1350 = vset.pattern.permute.xlu0 6
        %1351 = vperm.xlu0 %1350, %v240
        %v1352 = vpop.permute.xlu0 %1351
        %1354 = vset.pattern.permute.xlu0 6
        %1355 = vperm.xlu0 %1354, %v241
        %v1356 = vpop.permute.xlu0 %1355
        %1358 = vset.pattern.permute.xlu0 6
        %1359 = vperm.xlu0 %1358, %v242
        %v1360 = vpop.permute.xlu0 %1359
        %1362 = vset.pattern.permute.xlu0 6
        %1363 = vperm.xlu0 %1362, %v243
        %v1364 = vpop.permute.xlu0 %1363
        %1366 = vset.pattern.permute.xlu0 6
        %1367 = vperm.xlu0 %1366, %v244
        %v1368 = vpop.permute.xlu0 %1367
        %1370 = vset.pattern.permute.xlu0 6
        %1371 = vperm.xlu0 %1370, %v245
        %v1372 = vpop.permute.xlu0 %1371
        %1374 = vset.pattern.permute.xlu0 6
        %1375 = vperm.xlu0 %1374, %v246
        %v1376 = vpop.permute.xlu0 %1375
        %1378 = vset.pattern.permute.xlu0 6
        %1379 = vperm.xlu0 %1378, %v247
        %v1380 = vpop.permute.xlu0 %1379
        %1382 = vset.pattern.permute.xlu0 6
        %1383 = vperm.xlu0 %1382, %v248
        %v1384 = vpop.permute.xlu0 %1383
        %1386 = vset.pattern.permute.xlu0 6
        %1387 = vperm.xlu0 %1386, %v249
        %v1388 = vpop.permute.xlu0 %1387
        %1390 = vset.pattern.permute.xlu0 6
        %1391 = vperm.xlu0 %1390, %v250
        %v1392 = vpop.permute.xlu0 %1391
        %1394 = vset.pattern.permute.xlu0 6
        %1395 = vperm.xlu0 %1394, %v251
        %v1396 = vpop.permute.xlu0 %1395
        %1398 = vset.pattern.permute.xlu0 6
        %1399 = vperm.xlu0 %1398, %v252
        %v1400 = vpop.permute.xlu0 %1399
        %1402 = vset.pattern.permute.xlu0 6
        %1403 = vperm.xlu0 %1402, %v253
        %v1404 = vpop.permute.xlu0 %1403
        %1406 = vset.pattern.permute.xlu0 6
        %1407 = vperm.xlu0 %1406, %v254
        %v1408 = vpop.permute.xlu0 %1407
        %1410 = vset.pattern.permute.xlu0 6
        %1411 = vperm.xlu0 %1410, %v255
        %v1412 = vpop.permute.xlu0 %1411
        %1414 = vset.pattern.permute.xlu0 6
        %1415 = vperm.xlu0 %1414, %v256
        %v1416 = vpop.permute.xlu0 %1415
        %1418 = vset.pattern.permute.xlu0 6
        %1419 = vperm.xlu0 %1418, %v257
        %v1420 = vpop.permute.xlu0 %1419
        %1422 = vset.pattern.permute.xlu0 6
        %1423 = vperm.xlu0 %1422, %v258
        %v1424 = vpop.permute.xlu0 %1423
        %1426 = vset.pattern.permute.xlu0 6
        %1427 = vperm.xlu0 %1426, %v259
        %v1428 = vpop.permute.xlu0 %1427
        %1430 = vset.pattern.permute.xlu0 6
        %1431 = vperm.xlu0 %1430, %v260
        %v1432 = vpop.permute.xlu0 %1431
        %1434 = vset.pattern.permute.xlu0 6
        %1435 = vperm.xlu0 %1434, %v261
        %v1436 = vpop.permute.xlu0 %1435
        %1438 = vset.pattern.permute.xlu0 6
        %1439 = vperm.xlu0 %1438, %v262
        %v1440 = vpop.permute.xlu0 %1439
        %1442 = vset.pattern.permute.xlu0 6
        %1443 = vperm.xlu0 %1442, %v263
        %v1444 = vpop.permute.xlu0 %1443
        %1446 = vset.pattern.permute.xlu0 6
        %1447 = vperm.xlu0 %1446, %v264
        %v1448 = vpop.permute.xlu0 %1447
        %1450 = vset.pattern.permute.xlu0 6
        %1451 = vperm.xlu0 %1450, %v265
        %v1452 = vpop.permute.xlu0 %1451
        %1454 = vset.pattern.permute.xlu0 6
        %1455 = vperm.xlu0 %1454, %v266
        %v1456 = vpop.permute.xlu0 %1455
        %1458 = vset.pattern.permute.xlu0 6
        %1459 = vperm.xlu0 %1458, %v267
        %v1460 = vpop.permute.xlu0 %1459
        %1462 = vset.pattern.permute.xlu0 6
        %1463 = vperm.xlu0 %1462, %v268
        %v1464 = vpop.permute.xlu0 %1463
        %1466 = vset.pattern.permute.xlu0 6
        %1467 = vperm.xlu0 %1466, %v269
        %v1468 = vpop.permute.xlu0 %1467
        %v1502 = vunpack.c.l.b16 %v1278
        %v1503 = vunpack.c.h.b16 %v1278
        %v1504 = vunpack.c.l.b16 %v1279
        %v1505 = vunpack.c.h.b16 %v1279
        %v1506 = vunpack.c.l.b16 %v1280
        %v1507 = vunpack.c.h.b16 %v1280
        %v1508 = vunpack.c.l.b16 %v1281
        %v1509 = vunpack.c.h.b16 %v1281
        %v1510 = vunpack.c.l.b16 %v1282
        %v1511 = vunpack.c.h.b16 %v1282
        %v1512 = vunpack.c.l.b16 %v1283
        %v1513 = vunpack.c.h.b16 %v1283
        %v1514 = vunpack.c.l.b16 %v1284
        %v1515 = vunpack.c.h.b16 %v1284
        %v1516 = vunpack.c.l.b16 %v1285
        %v1517 = vunpack.c.h.b16 %v1285
        %v1518 = vunpack.c.l.b16 %v1286
        %v1519 = vunpack.c.h.b16 %v1286
        %v1520 = vunpack.c.l.b16 %v1287
        %v1521 = vunpack.c.h.b16 %v1287
        %v1522 = vunpack.c.l.b16 %v1288
        %v1523 = vunpack.c.h.b16 %v1288
        %v1524 = vunpack.c.l.b16 %v1289
        %v1525 = vunpack.c.h.b16 %v1289
        %v1526 = vunpack.c.l.b16 %v1290
        %v1527 = vunpack.c.h.b16 %v1290
        %v1528 = vunpack.c.l.b16 %v1291
        %v1529 = vunpack.c.h.b16 %v1291
        %v1530 = vunpack.c.l.b16 %v1292
        %v1531 = vunpack.c.h.b16 %v1292
        %v1532 = vunpack.c.l.b16 %v1293
        %v1533 = vunpack.c.h.b16 %v1293
        %v1534 = vunpack.c.l.b16 %v1294
        %v1535 = vunpack.c.h.b16 %v1294
        %v1536 = vunpack.c.l.b16 %v1295
        %v1537 = vunpack.c.h.b16 %v1295
        %v1538 = vunpack.c.l.b16 %v1296
        %v1539 = vunpack.c.h.b16 %v1296
        %v1540 = vunpack.c.l.b16 %v1297
        %v1541 = vunpack.c.h.b16 %v1297
        %v1542 = vunpack.c.l.b16 %v1298
        %v1543 = vunpack.c.h.b16 %v1298
        %v1544 = vunpack.c.l.b16 %v1299
        %v1545 = vunpack.c.h.b16 %v1299
        %v1546 = vunpack.c.l.b16 %v1300
        %v1547 = vunpack.c.h.b16 %v1300
        %v1548 = vunpack.c.l.b16 %v1301
        %v1549 = vunpack.c.h.b16 %v1301
        %v1550 = vunpack.c.l.b16 %v1302
        %v1551 = vunpack.c.h.b16 %v1302
        %v1552 = vunpack.c.l.b16 %v1303
        %v1553 = vunpack.c.h.b16 %v1303
        %v1554 = vunpack.c.l.b16 %v1304
        %v1555 = vunpack.c.h.b16 %v1304
        %v1556 = vunpack.c.l.b16 %v1305
        %v1557 = vunpack.c.h.b16 %v1305
        %v1558 = vunpack.c.l.b16 %v1306
        %v1559 = vunpack.c.h.b16 %v1306
        %v1560 = vunpack.c.l.b16 %v1307
        %v1561 = vunpack.c.h.b16 %v1307
        %v1562 = vunpack.c.l.b16 %v1308
        %v1563 = vunpack.c.h.b16 %v1308
        %v1564 = vunpack.c.l.b16 %v1309
        %v1565 = vunpack.c.h.b16 %v1309
        %v1566 = vpack.c.b16 %v1504, %v1502
        %v1567 = vpack.c.b16 %v1505, %v1503
        %v1568 = vpack.c.b16 %v1508, %v1506
        %v1569 = vpack.c.b16 %v1509, %v1507
        %v1570 = vpack.c.b16 %v1512, %v1510
        %v1571 = vpack.c.b16 %v1513, %v1511
        %v1572 = vpack.c.b16 %v1516, %v1514
        %v1573 = vpack.c.b16 %v1517, %v1515
        %v1574 = vpack.c.b16 %v1520, %v1518
        %v1575 = vpack.c.b16 %v1521, %v1519
        %v1576 = vpack.c.b16 %v1524, %v1522
        %v1577 = vpack.c.b16 %v1525, %v1523
        %v1578 = vpack.c.b16 %v1528, %v1526
        %v1579 = vpack.c.b16 %v1529, %v1527
        %v1580 = vpack.c.b16 %v1532, %v1530
        %v1581 = vpack.c.b16 %v1533, %v1531
        %v1582 = vpack.c.b16 %v1536, %v1534
        %v1583 = vpack.c.b16 %v1537, %v1535
        %v1584 = vpack.c.b16 %v1540, %v1538
        %v1585 = vpack.c.b16 %v1541, %v1539
        %v1586 = vpack.c.b16 %v1544, %v1542
        %v1587 = vpack.c.b16 %v1545, %v1543
        %v1588 = vpack.c.b16 %v1548, %v1546
        %v1589 = vpack.c.b16 %v1549, %v1547
        %v1590 = vpack.c.b16 %v1552, %v1550
        %v1591 = vpack.c.b16 %v1553, %v1551
        %v1592 = vpack.c.b16 %v1556, %v1554
        %v1593 = vpack.c.b16 %v1557, %v1555
        %v1594 = vpack.c.b16 %v1560, %v1558
        %v1595 = vpack.c.b16 %v1561, %v1559
        %v1596 = vpack.c.b16 %v1564, %v1562
        %v1597 = vpack.c.b16 %v1565, %v1563
        %1630 = vmatprep.subr.bf16.mxu0 %v1311
        %1631 = vmatpush1.bf16.msra.mxu0 %v1310
        %1632 = vmatprep.subr.bf16.mxu0 %v1313
        %1633 = vmatpush1.bf16.msra.mxu0 %v1312
        %1634 = vmatprep.subr.bf16.mxu0 %v1315
        %1635 = vmatpush1.bf16.msra.mxu0 %v1314
        %1636 = vmatprep.subr.bf16.mxu0 %v1317
        %1637 = vmatpush1.bf16.msra.mxu0 %v1316
        %1638 = vmatprep.subr.bf16.mxu0 %v1319
        %1639 = vmatpush1.bf16.msra.mxu0 %v1318
        %1640 = vmatprep.subr.bf16.mxu0 %v1321
        %1641 = vmatpush1.bf16.msra.mxu0 %v1320
        %1642 = vmatprep.subr.bf16.mxu0 %v1323
        %1643 = vmatpush1.bf16.msra.mxu0 %v1322
        %1644 = vmatprep.subr.bf16.mxu0 %v1325
        %1645 = vmatpush1.bf16.msra.mxu0 %v1324
        %1646 = vmatprep.subr.bf16.mxu0 %v1327
        %1647 = vmatpush1.bf16.msra.mxu0 %v1326
        %1648 = vmatprep.subr.bf16.mxu0 %v1329
        %1649 = vmatpush1.bf16.msra.mxu0 %v1328
        %1650 = vmatprep.subr.bf16.mxu0 %v1331
        %1651 = vmatpush1.bf16.msra.mxu0 %v1330
        %1652 = vmatprep.subr.bf16.mxu0 %v1333
        %1653 = vmatpush1.bf16.msra.mxu0 %v1332
        %1654 = vmatprep.subr.bf16.mxu0 %v1335
        %1655 = vmatpush1.bf16.msra.mxu0 %v1334
        %1656 = vmatprep.subr.bf16.mxu0 %v1337
        %1657 = vmatpush1.bf16.msra.mxu0 %v1336
        %1658 = vmatprep.subr.bf16.mxu0 %v1339
        %1659 = vmatpush1.bf16.msra.mxu0 %v1338
        %1660 = vmatprep.subr.bf16.mxu0 %v1341
        %1661 = vmatpush1.bf16.msra.mxu0 %v1340
        %1662 = vmatprep.mubr.bf16.mxu0 %v1567
        %1663 = vmatmul.mubr.bf16.gmra.mrb[0].mxu0 %v1566
        %v1664 = vpop.f32.mrb[0].mxu0
        %v1665 = vadd.f32 %v1344, %v1664
        %v1666 = vpop.f32.mrb[0].mxu0
        %v1667 = vadd.f32 %v1344, %v1666
        %v1668 = vpop.f32.mrb[0].mxu0
        %v1669 = vadd.f32 %v1348, %v1668
        %v1670 = vpop.f32.mrb[0].mxu0
        %v1671 = vadd.f32 %v1348, %v1670
        %1672 = vmatprep.mubr.bf16.mxu0 %v1569
        %1673 = vmatmul.mubr.bf16.gmra.mrb[0].mxu0 %v1568
        %v1674 = vpop.f32.mrb[0].mxu0
        %v1675 = vadd.f32 %v1352, %v1674
        %v1676 = vpop.f32.mrb[0].mxu0
        %v1677 = vadd.f32 %v1352, %v1676
        %v1678 = vpop.f32.mrb[0].mxu0
        %v1679 = vadd.f32 %v1356, %v1678
        %v1680 = vpop.f32.mrb[0].mxu0
        %v1681 = vadd.f32 %v1356, %v1680
        %1682 = vmatprep.mubr.bf16.mxu0 %v1571
        %1683 = vmatmul.mubr.bf16.gmra.mrb[0].mxu0 %v1570
        %v1684 = vpop.f32.mrb[0].mxu0
        %v1685 = vadd.f32 %v1360, %v1684
        %v1686 = vpop.f32.mrb[0].mxu0
        %v1687 = vadd.f32 %v1360, %v1686
        %v1688 = vpop.f32.mrb[0].mxu0
        %v1689 = vadd.f32 %v1364, %v1688
        %v1690 = vpop.f32.mrb[0].mxu0
        %v1691 = vadd.f32 %v1364, %v1690
        %1692 = vmatprep.mubr.bf16.mxu0 %v1573
        %1693 = vmatmul.mubr.bf16.gmra.mrb[0].mxu0 %v1572
        %v1694 = vpop.f32.mrb[0].mxu0
        %v1695 = vadd.f32 %v1368, %v1694
        %v1696 = vpop.f32.mrb[0].mxu0
        %v1697 = vadd.f32 %v1368, %v1696
        %v1698 = vpop.f32.mrb[0].mxu0
        %v1699 = vadd.f32 %v1372, %v1698
        %v1700 = vpop.f32.mrb[0].mxu0
        %v1701 = vadd.f32 %v1372, %v1700
        %1702 = vmatprep.mubr.bf16.mxu0 %v1575
        %1703 = vmatmul.mubr.bf16.gmra.mrb[0].mxu0 %v1574
        %v1704 = vpop.f32.mrb[0].mxu0
        %v1705 = vadd.f32 %v1376, %v1704
        %v1706 = vpop.f32.mrb[0].mxu0
        %v1707 = vadd.f32 %v1376, %v1706
        %v1708 = vpop.f32.mrb[0].mxu0
        %v1709 = vadd.f32 %v1380, %v1708
        %v1710 = vpop.f32.mrb[0].mxu0
        %v1711 = vadd.f32 %v1380, %v1710
        %1712 = vmatprep.mubr.bf16.mxu0 %v1577
        %1713 = vmatmul.mubr.bf16.gmra.mrb[0].mxu0 %v1576
        %v1714 = vpop.f32.mrb[0].mxu0
        %v1715 = vadd.f32 %v1384, %v1714
        %v1716 = vpop.f32.mrb[0].mxu0
        %v1717 = vadd.f32 %v1384, %v1716
        %v1718 = vpop.f32.mrb[0].mxu0
        %v1719 = vadd.f32 %v1388, %v1718
        %v1720 = vpop.f32.mrb[0].mxu0
        %v1721 = vadd.f32 %v1388, %v1720
        %1722 = vmatprep.mubr.bf16.mxu0 %v1579
        %1723 = vmatmul.mubr.bf16.gmra.mrb[0].mxu0 %v1578
        %v1724 = vpop.f32.mrb[0].mxu0
        %v1725 = vadd.f32 %v1392, %v1724
        %v1726 = vpop.f32.mrb[0].mxu0
        %v1727 = vadd.f32 %v1392, %v1726
        %v1728 = vpop.f32.mrb[0].mxu0
        %v1729 = vadd.f32 %v1396, %v1728
        %v1730 = vpop.f32.mrb[0].mxu0
        %v1731 = vadd.f32 %v1396, %v1730
        %1732 = vmatprep.mubr.bf16.mxu0 %v1581
        %1733 = vmatmul.mubr.bf16.gmra.mrb[0].mxu0 %v1580
        %v1734 = vpop.f32.mrb[0].mxu0
        %v1735 = vadd.f32 %v1400, %v1734
        %v1736 = vpop.f32.mrb[0].mxu0
        %v1737 = vadd.f32 %v1400, %v1736
        %v1738 = vpop.f32.mrb[0].mxu0
        %v1739 = vadd.f32 %v1404, %v1738
        %v1740 = vpop.f32.mrb[0].mxu0
        %v1741 = vadd.f32 %v1404, %v1740
        %1742 = vmatprep.mubr.bf16.mxu0 %v1583
        %1743 = vmatmul.mubr.bf16.gmra.mrb[0].mxu0 %v1582
        %v1744 = vpop.f32.mrb[0].mxu0
        %v1745 = vadd.f32 %v1408, %v1744
        %v1746 = vpop.f32.mrb[0].mxu0
        %v1747 = vadd.f32 %v1408, %v1746
        %v1748 = vpop.f32.mrb[0].mxu0
        %v1749 = vadd.f32 %v1412, %v1748
        %v1750 = vpop.f32.mrb[0].mxu0
        %v1751 = vadd.f32 %v1412, %v1750
        %1752 = vmatprep.mubr.bf16.mxu0 %v1585
        %1753 = vmatmul.mubr.bf16.gmra.mrb[0].mxu0 %v1584
        %v1754 = vpop.f32.mrb[0].mxu0
        %v1755 = vadd.f32 %v1416, %v1754
        %v1756 = vpop.f32.mrb[0].mxu0
        %v1757 = vadd.f32 %v1416, %v1756
        %v1758 = vpop.f32.mrb[0].mxu0
        %v1759 = vadd.f32 %v1420, %v1758
        %v1760 = vpop.f32.mrb[0].mxu0
        %v1761 = vadd.f32 %v1420, %v1760
        %1762 = vmatprep.mubr.bf16.mxu0 %v1587
        %1763 = vmatmul.mubr.bf16.gmra.mrb[0].mxu0 %v1586
        %v1764 = vpop.f32.mrb[0].mxu0
        %v1765 = vadd.f32 %v1424, %v1764
        %v1766 = vpop.f32.mrb[0].mxu0
        %v1767 = vadd.f32 %v1424, %v1766
        %v1768 = vpop.f32.mrb[0].mxu0
        %v1769 = vadd.f32 %v1428, %v1768
        %v1770 = vpop.f32.mrb[0].mxu0
        %v1771 = vadd.f32 %v1428, %v1770
        %1772 = vmatprep.mubr.bf16.mxu0 %v1589
        %1773 = vmatmul.mubr.bf16.gmra.mrb[0].mxu0 %v1588
        %v1774 = vpop.f32.mrb[0].mxu0
        %v1775 = vadd.f32 %v1432, %v1774
        %v1776 = vpop.f32.mrb[0].mxu0
        %v1777 = vadd.f32 %v1432, %v1776
        %v1778 = vpop.f32.mrb[0].mxu0
        %v1779 = vadd.f32 %v1436, %v1778
        %v1780 = vpop.f32.mrb[0].mxu0
        %v1781 = vadd.f32 %v1436, %v1780
        %1782 = vmatprep.mubr.bf16.mxu0 %v1591
        %1783 = vmatmul.mubr.bf16.gmra.mrb[0].mxu0 %v1590
        %v1784 = vpop.f32.mrb[0].mxu0
        %v1785 = vadd.f32 %v1440, %v1784
        %v1786 = vpop.f32.mrb[0].mxu0
        %v1787 = vadd.f32 %v1440, %v1786
        %v1788 = vpop.f32.mrb[0].mxu0
        %v1789 = vadd.f32 %v1444, %v1788
        %v1790 = vpop.f32.mrb[0].mxu0
        %v1791 = vadd.f32 %v1444, %v1790
        %1792 = vmatprep.mubr.bf16.mxu0 %v1593
        %1793 = vmatmul.mubr.bf16.gmra.mrb[0].mxu0 %v1592
        %v1794 = vpop.f32.mrb[0].mxu0
        %v1795 = vadd.f32 %v1448, %v1794
        %v1796 = vpop.f32.mrb[0].mxu0
        %v1797 = vadd.f32 %v1448, %v1796
        %v1798 = vpop.f32.mrb[0].mxu0
        %v1799 = vadd.f32 %v1452, %v1798
        %v1800 = vpop.f32.mrb[0].mxu0
        %v1801 = vadd.f32 %v1452, %v1800
        %1802 = vmatprep.mubr.bf16.mxu0 %v1595
        %1803 = vmatmul.mubr.bf16.gmra.mrb[0].mxu0 %v1594
        %v1804 = vpop.f32.mrb[0].mxu0
        %v1805 = vadd.f32 %v1456, %v1804
        %v1806 = vpop.f32.mrb[0].mxu0
        %v1807 = vadd.f32 %v1456, %v1806
        %v1808 = vpop.f32.mrb[0].mxu0
        %v1809 = vadd.f32 %v1460, %v1808
        %v1810 = vpop.f32.mrb[0].mxu0
        %v1811 = vadd.f32 %v1460, %v1810
        %1812 = vmatprep.mubr.bf16.mxu0 %v1597
        %1813 = vmatmul.mubr.bf16.gmra.mrb[0].mxu0 %v1596
        %v1814 = vpop.f32.mrb[0].mxu0
        %v1815 = vadd.f32 %v1464, %v1814
        %v1816 = vpop.f32.mrb[0].mxu0
        %v1817 = vadd.f32 %v1464, %v1816
        %v1818 = vpop.f32.mrb[0].mxu0
        %v1819 = vadd.f32 %v1468, %v1818
        %v1820 = vpop.f32.mrb[0].mxu0
        %v1821 = vadd.f32 %v1468, %v1820
        %1822 = vdwg.mxu0
        %v1823 = vtanh.pop %v1665
        %v1824 = vtanh.pop %v1667
        %v1825 = vtanh.pop %v1669
        %v1826 = vtanh.pop %v1671
        %v1827 = vtanh.pop %v1675
        %v1828 = vtanh.pop %v1677
        %v1829 = vtanh.pop %v1679
        %v1830 = vtanh.pop %v1681
        %v1831 = vtanh.pop %v1685
        %v1832 = vtanh.pop %v1687
        %v1833 = vtanh.pop %v1689
        %v1834 = vtanh.pop %v1691
        %v1835 = vtanh.pop %v1695
        %v1836 = vtanh.pop %v1697
        %v1837 = vtanh.pop %v1699
        %v1838 = vtanh.pop %v1701
        %v1839 = vtanh.pop %v1705
        %v1840 = vtanh.pop %v1707
        %v1841 = vtanh.pop %v1709
        %v1842 = vtanh.pop %v1711
        %v1843 = vtanh.pop %v1715
        %v1844 = vtanh.pop %v1717
        %v1845 = vtanh.pop %v1719
        %v1846 = vtanh.pop %v1721
        %v1847 = vtanh.pop %v1725
        %v1848 = vtanh.pop %v1727
        %v1849 = vtanh.pop %v1729
        %v1850 = vtanh.pop %v1731
        %v1851 = vtanh.pop %v1735
        %v1852 = vtanh.pop %v1737
        %v1853 = vtanh.pop %v1739
        %v1854 = vtanh.pop %v1741
        %v1855 = vadd.f32 %v1823, %v590
        %v1856 = vadd.f32 %v1824, %v591
        %v1857 = vadd.f32 %v1825, %v592
        %v1858 = vadd.f32 %v1826, %v593
        %v1859 = vadd.f32 %v1827, %v594
        %v1860 = vadd.f32 %v1828, %v595
        %v1861 = vadd.f32 %v1829, %v596
        %v1862 = vadd.f32 %v1830, %v597
        %v1863 = vadd.f32 %v1831, %v598
        %v1864 = vadd.f32 %v1832, %v599
        %v1865 = vadd.f32 %v1833, %v600
        %v1866 = vadd.f32 %v1834, %v601
        %v1867 = vadd.f32 %v1835, %v602
        %v1868 = vadd.f32 %v1836, %v603
        %v1869 = vadd.f32 %v1837, %v604
        %v1870 = vadd.f32 %v1838, %v605
        %v1871 = vadd.f32 %v1839, %v606
        %v1872 = vadd.f32 %v1840, %v607
        %v1873 = vadd.f32 %v1841, %v608
        %v1874 = vadd.f32 %v1842, %v609
        %v1875 = vadd.f32 %v1843, %v610
        %v1876 = vadd.f32 %v1844, %v611
        %v1877 = vadd.f32 %v1845, %v612
        %v1878 = vadd.f32 %v1846, %v613
        %v1879 = vadd.f32 %v1847, %v614
        %v1880 = vadd.f32 %v1848, %v615
        %v1881 = vadd.f32 %v1849, %v616
        %v1882 = vadd.f32 %v1850, %v617
        %v1883 = vadd.f32 %v1851, %v618
        %v1884 = vadd.f32 %v1852, %v619
        %v1885 = vadd.f32 %v1853, %v620
        %v1886 = vadd.f32 %v1854, %v621
        %v1887 = vmax.f32 %v1745, 0.0
        %v1888 = vmax.f32 %v1747, 0.0
        %v1889 = vmax.f32 %v1749, 0.0
        %v1890 = vmax.f32 %v1751, 0.0
        %v1891 = vmax.f32 %v1755, 0.0
        %v1892 = vmax.f32 %v1757, 0.0
        %v1893 = vmax.f32 %v1759, 0.0
        %v1894 = vmax.f32 %v1761, 0.0
        %v1895 = vmax.f32 %v1765, 0.0
        %v1896 = vmax.f32 %v1767, 0.0
        %v1897 = vmax.f32 %v1769, 0.0
        %v1898 = vmax.f32 %v1771, 0.0
        %v1899 = vmax.f32 %v1775, 0.0
        %v1900 = vmax.f32 %v1777, 0.0
        %v1901 = vmax.f32 %v1779, 0.0
        %v1902 = vmax.f32 %v1781, 0.0
        %v1903 = vmax.f32 %v1785, 0.0
        %v1904 = vmax.f32 %v1787, 0.0
        %v1905 = vmax.f32 %v1789, 0.0
        %v1906 = vmax.f32 %v1791, 0.0
        %v1907 = vmax.f32 %v1795, 0.0
        %v1908 = vmax.f32 %v1797, 0.0
        %v1909 = vmax.f32 %v1799, 0.0
        %v1910 = vmax.f32 %v1801, 0.0
        %v1911 = vmax.f32 %v1805, 0.0
        %v1912 = vmax.f32 %v1807, 0.0
        %v1913 = vmax.f32 %v1809, 0.0
        %v1914 = vmax.f32 %v1811, 0.0
        %v1915 = vmax.f32 %v1815, 0.0
        %v1916 = vmax.f32 %v1817, 0.0
        %v1917 = vmax.f32 %v1819, 0.0
        %v1918 = vmax.f32 %v1821, 0.0
        %s1919 = scalar_lea.vmem %s1, 256
        %v1920 = vld [vmem:[%s1919] sm:$0xff]
        %v1921 = vld [vmem:[%s1919 + $0x8] sm:$0xff]
        %v1922 = vld [vmem:[%s1919 + $0x10] sm:$0xff]
        %v1923 = vld [vmem:[%s1919 + $0x18] sm:$0xff]
        %v1924 = vld [vmem:[%s1919 + $0x20] sm:$0xff]
        %v1925 = vld [vmem:[%s1919 + $0x28] sm:$0xff]
        %v1926 = vld [vmem:[%s1919 + $0x30] sm:$0xff]
        %v1927 = vld [vmem:[%s1919 + $0x38] sm:$0xff]
        %v1928 = vld [vmem:[%s1919 + $0x40] sm:$0xff]
        %v1929 = vld [vmem:[%s1919 + $0x48] sm:$0xff]
        %v1930 = vld [vmem:[%s1919 + $0x50] sm:$0xff]
        %v1931 = vld [vmem:[%s1919 + $0x58] sm:$0xff]
        %v1932 = vld [vmem:[%s1919 + $0x60] sm:$0xff]
        %v1933 = vld [vmem:[%s1919 + $0x68] sm:$0xff]
        %v1934 = vld [vmem:[%s1919 + $0x70] sm:$0xff]
        %v1935 = vld [vmem:[%s1919 + $0x78] sm:$0xff]
        %v1936 = vld [vmem:[%s1919 + $0x80] sm:$0xff]
        %v1937 = vld [vmem:[%s1919 + $0x88] sm:$0xff]
        %v1938 = vld [vmem:[%s1919 + $0x90] sm:$0xff]
        %v1939 = vld [vmem:[%s1919 + $0x98] sm:$0xff]
        %v1940 = vld [vmem:[%s1919 + $0xa0] sm:$0xff]
        %v1941 = vld [vmem:[%s1919 + $0xa8] sm:$0xff]
        %v1942 = vld [vmem:[%s1919 + $0xb0] sm:$0xff]
        %v1943 = vld [vmem:[%s1919 + $0xb8] sm:$0xff]
        %v1944 = vld [vmem:[%s1919 + $0xc0] sm:$0xff]
        %v1945 = vld [vmem:[%s1919 + $0xc8] sm:$0xff]
        %v1946 = vld [vmem:[%s1919 + $0xd0] sm:$0xff]
        %v1947 = vld [vmem:[%s1919 + $0xd8] sm:$0xff]
        %v1948 = vld [vmem:[%s1919 + $0xe0] sm:$0xff]
        %v1949 = vld [vmem:[%s1919 + $0xe8] sm:$0xff]
        %v1950 = vld [vmem:[%s1919 + $0xf0] sm:$0xff]
        %v1951 = vld [vmem:[%s1919 + $0xf8] sm:$0xff]
        %v1952 = vpack.c.bf16 %v1857, %v1855
        %v1953 = vpack.c.bf16 %v1858, %v1856
        %v1954 = vpack.c.bf16 %v1861, %v1859
        %v1955 = vpack.c.bf16 %v1862, %v1860
        %v1956 = vpack.c.bf16 %v1865, %v1863
        %v1957 = vpack.c.bf16 %v1866, %v1864
        %v1958 = vpack.c.bf16 %v1869, %v1867
        %v1959 = vpack.c.bf16 %v1870, %v1868
        %v1960 = vpack.c.bf16 %v1873, %v1871
        %v1961 = vpack.c.bf16 %v1874, %v1872
        %v1962 = vpack.c.bf16 %v1877, %v1875
        %v1963 = vpack.c.bf16 %v1878, %v1876
        %v1964 = vpack.c.bf16 %v1881, %v1879
        %v1965 = vpack.c.bf16 %v1882, %v1880
        %v1966 = vpack.c.bf16 %v1885, %v1883
        %v1967 = vpack.c.bf16 %v1886, %v1884
        %v1968 = vpack.c.bf16 %v1889, %v1887
        %v1969 = vpack.c.bf16 %v1890, %v1888
        %v1970 = vpack.c.bf16 %v1893, %v1891
        %v1971 = vpack.c.bf16 %v1894, %v1892
        %v1972 = vpack.c.bf16 %v1897, %v1895
        %v1973 = vpack.c.bf16 %v1898, %v1896
        %v1974 = vpack.c.bf16 %v1901, %v1899
        %v1975 = vpack.c.bf16 %v1902, %v1900
        %v1976 = vpack.c.bf16 %v1905, %v1903
        %v1977 = vpack.c.bf16 %v1906, %v1904
        %v1978 = vpack.c.bf16 %v1909, %v1907
        %v1979 = vpack.c.bf16 %v1910, %v1908
        %v1980 = vpack.c.bf16 %v1913, %v1911
        %v1981 = vpack.c.bf16 %v1914, %v1912
        %v1982 = vpack.c.bf16 %v1917, %v1915
        %v1983 = vpack.c.bf16 %v1918, %v1916
        %1984 = vset.pattern.permute.xlu0 7
        %1985 = vperm.xlu0 %1984, %v238
        %v1986 = vpop.permute.xlu0 %1985
        %1988 = vset.pattern.permute.xlu0 7
        %1989 = vperm.xlu0 %1988, %v239
        %v1990 = vpop.permute.xlu0 %1989
        %1992 = vset.pattern.permute.xlu0 7
        %1993 = vperm.xlu0 %1992, %v240
        %v1994 = vpop.permute.xlu0 %1993
        %1996 = vset.pattern.permute.xlu0 7
        %1997 = vperm.xlu0 %1996, %v241
        %v1998 = vpop.permute.xlu0 %1997
        %2000 = vset.pattern.permute.xlu0 7
        %2001 = vperm.xlu0 %2000, %v242
        %v2002 = vpop.permute.xlu0 %2001
        %2004 = vset.pattern.permute.xlu0 7
        %2005 = vperm.xlu0 %2004, %v243
        %v2006 = vpop.permute.xlu0 %2005
        %2008 = vset.pattern.permute.xlu0 7
        %2009 = vperm.xlu0 %2008, %v244
        %v2010 = vpop.permute.xlu0 %2009
        %2012 = vset.pattern.permute.xlu0 7
        %2013 = vperm.xlu0 %2012, %v245
        %v2014 = vpop.permute.xlu0 %2013
        %2016 = vset.pattern.permute.xlu0 7
        %2017 = vperm.xlu0 %2016, %v246
        %v2018 = vpop.permute.xlu0 %2017
        %2020 = vset.pattern.permute.xlu0 7
        %2021 = vperm.xlu0 %2020, %v247
        %v2022 = vpop.permute.xlu0 %2021
        %2024 = vset.pattern.permute.xlu0 7
        %2025 = vperm.xlu0 %2024, %v248
        %v2026 = vpop.permute.xlu0 %2025
        %2028 = vset.pattern.permute.xlu0 7
        %2029 = vperm.xlu0 %2028, %v249
        %v2030 = vpop.permute.xlu0 %2029
        %2032 = vset.pattern.permute.xlu0 7
        %2033 = vperm.xlu0 %2032, %v250
        %v2034 = vpop.permute.xlu0 %2033
        %2036 = vset.pattern.permute.xlu0 7
        %2037 = vperm.xlu0 %2036, %v251
        %v2038 = vpop.permute.xlu0 %2037
        %2040 = vset.pattern.permute.xlu0 7
        %2041 = vperm.xlu0 %2040, %v252
        %v2042 = vpop.permute.xlu0 %2041
        %2044 = vset.pattern.permute.xlu0 7
        %2045 = vperm.xlu0 %2044, %v253
        %v2046 = vpop.permute.xlu0 %2045
        %2048 = vset.pattern.permute.xlu0 7
        %2049 = vperm.xlu0 %2048, %v254
        %v2050 = vpop.permute.xlu0 %2049
        %2052 = vset.pattern.permute.xlu0 7
        %2053 = vperm.xlu0 %2052, %v255
        %v2054 = vpop.permute.xlu0 %2053
        %2056 = vset.pattern.permute.xlu0 7
        %2057 = vperm.xlu0 %2056, %v256
        %v2058 = vpop.permute.xlu0 %2057
        %2060 = vset.pattern.permute.xlu0 7
        %2061 = vperm.xlu0 %2060, %v257
        %v2062 = vpop.permute.xlu0 %2061
        %2064 = vset.pattern.permute.xlu0 7
        %2065 = vperm.xlu0 %2064, %v258
        %v2066 = vpop.permute.xlu0 %2065
        %2068 = vset.pattern.permute.xlu0 7
        %2069 = vperm.xlu0 %2068, %v259
        %v2070 = vpop.permute.xlu0 %2069
        %2072 = vset.pattern.permute.xlu0 7
        %2073 = vperm.xlu0 %2072, %v260
        %v2074 = vpop.permute.xlu0 %2073
        %2076 = vset.pattern.permute.xlu0 7
        %2077 = vperm.xlu0 %2076, %v261
        %v2078 = vpop.permute.xlu0 %2077
        %2080 = vset.pattern.permute.xlu0 7
        %2081 = vperm.xlu0 %2080, %v262
        %v2082 = vpop.permute.xlu0 %2081
        %2084 = vset.pattern.permute.xlu0 7
        %2085 = vperm.xlu0 %2084, %v263
        %v2086 = vpop.permute.xlu0 %2085
        %2088 = vset.pattern.permute.xlu0 7
        %2089 = vperm.xlu0 %2088, %v264
        %v2090 = vpop.permute.xlu0 %2089
        %2092 = vset.pattern.permute.xlu0 7
        %2093 = vperm.xlu0 %2092, %v265
        %v2094 = vpop.permute.xlu0 %2093
        %2096 = vset.pattern.permute.xlu0 7
        %2097 = vperm.xlu0 %2096, %v266
        %v2098 = vpop.permute.xlu0 %2097
        %2100 = vset.pattern.permute.xlu0 7
        %2101 = vperm.xlu0 %2100, %v267
        %v2102 = vpop.permute.xlu0 %2101
        %2104 = vset.pattern.permute.xlu0 7
        %2105 = vperm.xlu0 %2104, %v268
        %v2106 = vpop.permute.xlu0 %2105
        %2108 = vset.pattern.permute.xlu0 7
        %2109 = vperm.xlu0 %2108, %v269
        %v2110 = vpop.permute.xlu0 %2109
        %v2144 = vunpack.c.l.b16 %v1920
        %v2145 = vunpack.c.h.b16 %v1920
        %v2146 = vunpack.c.l.b16 %v1921
        %v2147 = vunpack.c.h.b16 %v1921
        %v2148 = vunpack.c.l.b16 %v1922
        %v2149 = vunpack.c.h.b16 %v1922
        %v2150 = vunpack.c.l.b16 %v1923
        %v2151 = vunpack.c.h.b16 %v1923
        %v2152 = vunpack.c.l.b16 %v1924
        %v2153 = vunpack.c.h.b16 %v1924
        %v2154 = vunpack.c.l.b16 %v1925
        %v2155 = vunpack.c.h.b16 %v1925
        %v2156 = vunpack.c.l.b16 %v1926
        %v2157 = vunpack.c.h.b16 %v1926
        %v2158 = vunpack.c.l.b16 %v1927
        %v2159 = vunpack.c.h.b16 %v1927
        %v2160 = vunpack.c.l.b16 %v1928
        %v2161 = vunpack.c.h.b16 %v1928
        %v2162 = vunpack.c.l.b16 %v1929
        %v2163 = vunpack.c.h.b16 %v1929
        %v2164 = vunpack.c.l.b16 %v1930
        %v2165 = vunpack.c.h.b16 %v1930
        %v2166 = vunpack.c.l.b16 %v1931
        %v2167 = vunpack.c.h.b16 %v1931
        %v2168 = vunpack.c.l.b16 %v1932
        %v2169 = vunpack.c.h.b16 %v1932
        %v2170 = vunpack.c.l.b16 %v1933
        %v2171 = vunpack.c.h.b16 %v1933
        %v2172 = vunpack.c.l.b16 %v1934
        %v2173 = vunpack.c.h.b16 %v1934
        %v2174 = vunpack.c.l.b16 %v1935
        %v2175 = vunpack.c.h.b16 %v1935
        %v2176 = vunpack.c.l.b16 %v1936
        %v2177 = vunpack.c.h.b16 %v1936
        %v2178 = vunpack.c.l.b16 %v1937
        %v2179 = vunpack.c.h.b16 %v1937
        %v2180 = vunpack.c.l.b16 %v1938
        %v2181 = vunpack.c.h.b16 %v1938
        %v2182 = vunpack.c.l.b16 %v1939
        %v2183 = vunpack.c.h.b16 %v1939
        %v2184 = vunpack.c.l.b16 %v1940
        %v2185 = vunpack.c.h.b16 %v1940
        %v2186 = vunpack.c.l.b16 %v1941
        %v2187 = vunpack.c.h.b16 %v1941
        %v2188 = vunpack.c.l.b16 %v1942
        %v2189 = vunpack.c.h.b16 %v1942
        %v2190 = vunpack.c.l.b16 %v1943
        %v2191 = vunpack.c.h.b16 %v1943
        %v2192 = vunpack.c.l.b16 %v1944
        %v2193 = vunpack.c.h.b16 %v1944
        %v2194 = vunpack.c.l.b16 %v1945
        %v2195 = vunpack.c.h.b16 %v1945
        %v2196 = vunpack.c.l.b16 %v1946
        %v2197 = vunpack.c.h.b16 %v1946
        %v2198 = vunpack.c.l.b16 %v1947
        %v2199 = vunpack.c.h.b16 %v1947
        %v2200 = vunpack.c.l.b16 %v1948
        %v2201 = vunpack.c.h.b16 %v1948
        %v2202 = vunpack.c.l.b16 %v1949
        %v2203 = vunpack.c.h.b16 %v1949
        %v2204 = vunpack.c.l.b16 %v1950
        %v2205 = vunpack.c.h.b16 %v1950
        %v2206 = vunpack.c.l.b16 %v1951
        %v2207 = vunpack.c.h.b16 %v1951
        %v2208 = vpack.c.b16 %v2146, %v2144
        %v2209 = vpack.c.b16 %v2147, %v2145
        %v2210 = vpack.c.b16 %v2150, %v2148
        %v2211 = vpack.c.b16 %v2151, %v2149
        %v2212 = vpack.c.b16 %v2154, %v2152
        %v2213 = vpack.c.b16 %v2155, %v2153
        %v2214 = vpack.c.b16 %v2158, %v2156
        %v2215 = vpack.c.b16 %v2159, %v2157
        %v2216 = vpack.c.b16 %v2162, %v2160
        %v2217 = vpack.c.b16 %v2163, %v2161
        %v2218 = vpack.c.b16 %v2166, %v2164
        %v2219 = vpack.c.b16 %v2167, %v2165
        %v2220 = vpack.c.b16 %v2170, %v2168
        %v2221 = vpack.c.b16 %v2171, %v2169
        %v2222 = vpack.c.b16 %v2174, %v2172
        %v2223 = vpack.c.b16 %v2175, %v2173
        %v2224 = vpack.c.b16 %v2178, %v2176
        %v2225 = vpack.c.b16 %v2179, %v2177
        %v2226 = vpack.c.b16 %v2182, %v2180
        %v2227 = vpack.c.b16 %v2183, %v2181
        %v2228 = vpack.c.b16 %v2186, %v2184
        %v2229 = vpack.c.b16 %v2187, %v2185
        %v2230 = vpack.c.b16 %v2190, %v2188
        %v2231 = vpack.c.b16 %v2191, %v2189
        %v2232 = vpack.c.b16 %v2194, %v2192
        %v2233 = vpack.c.b16 %v2195, %v2193
        %v2234 = vpack.c.b16 %v2198, %v2196
        %v2235 = vpack.c.b16 %v2199, %v2197
        %v2236 = vpack.c.b16 %v2202, %v2200
        %v2237 = vpack.c.b16 %v2203, %v2201
        %v2238 = vpack.c.b16 %v2206, %v2204
        %v2239 = vpack.c.b16 %v2207, %v2205
        %2272 = vmatprep.subr.bf16.mxu0 %v1953
        %2273 = vmatpush1.bf16.msra.mxu0 %v1952
        %2274 = vmatprep.subr.bf16.mxu0 %v1955
        %2275 = vmatpush1.bf16.msra.mxu0 %v1954
        %2276 = vmatprep.subr.bf16.mxu0 %v1957
        %2277 = vmatpush1.bf16.msra.mxu0 %v1956
        %2278 = vmatprep.subr.bf16.mxu0 %v1959
        %2279 = vmatpush1.bf16.msra.mxu0 %v1958
        %2280 = vmatprep.subr.bf16.mxu0 %v1961
        %2281 = vmatpush1.bf16.msra.mxu0 %v1960
        %2282 = vmatprep.subr.bf16.mxu0 %v1963
        %2283 = vmatpush1.bf16.msra.mxu0 %v1962
        %2284 = vmatprep.subr.bf16.mxu0 %v1965
        %2285 = vmatpush1.bf16.msra.mxu0 %v1964
        %2286 = vmatprep.subr.bf16.mxu0 %v1967
        %2287 = vmatpush1.bf16.msra.mxu0 %v1966
        %2288 = vmatprep.subr.bf16.mxu0 %v1969
        %2289 = vmatpush1.bf16.msra.mxu0 %v1968
        %2290 = vmatprep.subr.bf16.mxu0 %v1971
        %2291 = vmatpush1.bf16.msra.mxu0 %v1970
        %2292 = vmatprep.subr.bf16.mxu0 %v1973
        %2293 = vmatpush1.bf16.msra.mxu0 %v1972
        %2294 = vmatprep.subr.bf16.mxu0 %v1975
        %2295 = vmatpush1.bf16.msra.mxu0 %v1974
        %2296 = vmatprep.subr.bf16.mxu0 %v1977
        %2297 = vmatpush1.bf16.msra.mxu0 %v1976
        %2298 = vmatprep.subr.bf16.mxu0 %v1979
        %2299 = vmatpush1.bf16.msra.mxu0 %v1978
        %2300 = vmatprep.subr.bf16.mxu0 %v1981
        %2301 = vmatpush1.bf16.msra.mxu0 %v1980
        %2302 = vmatprep.subr.bf16.mxu0 %v1983
        %2303 = vmatpush1.bf16.msra.mxu0 %v1982
        %2304 = vmatprep.mubr.bf16.mxu0 %v2209
        %2305 = vmatmul.mubr.bf16.gmra.mrb[0].mxu0 %v2208
        %v2306 = vpop.f32.mrb[0].mxu0
        %v2307 = vadd.f32 %v1986, %v2306
        %v2308 = vpop.f32.mrb[0].mxu0
        %v2309 = vadd.f32 %v1986, %v2308
        %v2310 = vpop.f32.mrb[0].mxu0
        %v2311 = vadd.f32 %v1990, %v2310
        %v2312 = vpop.f32.mrb[0].mxu0
        %v2313 = vadd.f32 %v1990, %v2312
        %2314 = vmatprep.mubr.bf16.mxu0 %v2211
        %2315 = vmatmul.mubr.bf16.gmra.mrb[0].mxu0 %v2210
        %v2316 = vpop.f32.mrb[0].mxu0
        %v2317 = vadd.f32 %v1994, %v2316
        %v2318 = vpop.f32.mrb[0].mxu0
        %v2319 = vadd.f32 %v1994, %v2318
        %v2320 = vpop.f32.mrb[0].mxu0
        %v2321 = vadd.f32 %v1998, %v2320
        %v2322 = vpop.f32.mrb[0].mxu0
        %v2323 = vadd.f32 %v1998, %v2322
        %2324 = vmatprep.mubr.bf16.mxu0 %v2213
        %2325 = vmatmul.mubr.bf16.gmra.mrb[0].mxu0 %v2212
        %v2326 = vpop.f32.mrb[0].mxu0
        %v2327 = vadd.f32 %v2002, %v2326
        %v2328 = vpop.f32.mrb[0].mxu0
        %v2329 = vadd.f32 %v2002, %v2328
        %v2330 = vpop.f32.mrb[0].mxu0
        %v2331 = vadd.f32 %v2006, %v2330
        %v2332 = vpop.f32.mrb[0].mxu0
        %v2333 = vadd.f32 %v2006, %v2332
        %2334 = vmatprep.mubr.bf16.mxu0 %v2215
        %2335 = vmatmul.mubr.bf16.gmra.mrb[0].mxu0 %v2214
        %v2336 = vpop.f32.mrb[0].mxu0
        %v2337 = vadd.f32 %v2010, %v2336
        %v2338 = vpop.f32.mrb[0].mxu0
        %v2339 = vadd.f32 %v2010, %v2338
        %v2340 = vpop.f32.mrb[0].mxu0
        %v2341 = vadd.f32 %v2014, %v2340
        %v2342 = vpop.f32.mrb[0].mxu0
        %v2343 = vadd.f32 %v2014, %v2342
        %2344 = vmatprep.mubr.bf16.mxu0 %v2217
        %2345 = vmatmul.mubr.bf16.gmra.mrb[0].mxu0 %v2216
        %v2346 = vpop.f32.mrb[0].mxu0
        %v2347 = vadd.f32 %v2018, %v2346
        %v2348 = vpop.f32.mrb[0].mxu0
        %v2349 = vadd.f32 %v2018, %v2348
        %v2350 = vpop.f32.mrb[0].mxu0
        %v2351 = vadd.f32 %v2022, %v2350
        %v2352 = vpop.f32.mrb[0].mxu0
        %v2353 = vadd.f32 %v2022, %v2352
        %2354 = vmatprep.mubr.bf16.mxu0 %v2219
        %2355 = vmatmul.mubr.bf16.gmra.mrb[0].mxu0 %v2218
        %v2356 = vpop.f32.mrb[0].mxu0
        %v2357 = vadd.f32 %v2026, %v2356
        %v2358 = vpop.f32.mrb[0].mxu0
        %v2359 = vadd.f32 %v2026, %v2358
        %v2360 = vpop.f32.mrb[0].mxu0
        %v2361 = vadd.f32 %v2030, %v2360
        %v2362 = vpop.f32.mrb[0].mxu0
        %v2363 = vadd.f32 %v2030, %v2362
        %2364 = vmatprep.mubr.bf16.mxu0 %v2221
        %2365 = vmatmul.mubr.bf16.gmra.mrb[0].mxu0 %v2220
        %v2366 = vpop.f32.mrb[0].mxu0
        %v2367 = vadd.f32 %v2034, %v2366
        %v2368 = vpop.f32.mrb[0].mxu0
        %v2369 = vadd.f32 %v2034, %v2368
        %v2370 = vpop.f32.mrb[0].mxu0
        %v2371 = vadd.f32 %v2038, %v2370
        %v2372 = vpop.f32.mrb[0].mxu0
        %v2373 = vadd.f32 %v2038, %v2372
        %2374 = vmatprep.mubr.bf16.mxu0 %v2223
        %2375 = vmatmul.mubr.bf16.gmra.mrb[0].mxu0 %v2222
        %v2376 = vpop.f32.mrb[0].mxu0
        %v2377 = vadd.f32 %v2042, %v2376
        %v2378 = vpop.f32.mrb[0].mxu0
        %v2379 = vadd.f32 %v2042, %v2378
        %v2380 = vpop.f32.mrb[0].mxu0
        %v2381 = vadd.f32 %v2046, %v2380
        %v2382 = vpop.f32.mrb[0].mxu0
        %v2383 = vadd.f32 %v2046, %v2382
        %2384 = vmatprep.mubr.bf16.mxu0 %v2225
        %2385 = vmatmul.mubr.bf16.gmra.mrb[0].mxu0 %v2224
        %v2386 = vpop.f32.mrb[0].mxu0
        %v2387 = vadd.f32 %v2050, %v2386
        %v2388 = vpop.f32.mrb[0].mxu0
        %v2389 = vadd.f32 %v2050, %v2388
        %v2390 = vpop.f32.mrb[0].mxu0
        %v2391 = vadd.f32 %v2054, %v2390
        %v2392 = vpop.f32.mrb[0].mxu0
        %v2393 = vadd.f32 %v2054, %v2392
        %2394 = vmatprep.mubr.bf16.mxu0 %v2227
        %2395 = vmatmul.mubr.bf16.gmra.mrb[0].mxu0 %v2226
        %v2396 = vpop.f32.mrb[0].mxu0
        %v2397 = vadd.f32 %v2058, %v2396
        %v2398 = vpop.f32.mrb[0].mxu0
        %v2399 = vadd.f32 %v2058, %v2398
        %v2400 = vpop.f32.mrb[0].mxu0
        %v2401 = vadd.f32 %v2062, %v2400
        %v2402 = vpop.f32.mrb[0].mxu0
        %v2403 = vadd.f32 %v2062, %v2402
        %2404 = vmatprep.mubr.bf16.mxu0 %v2229
        %2405 = vmatmul.mubr.bf16.gmra.mrb[0].mxu0 %v2228
        %v2406 = vpop.f32.mrb[0].mxu0
        %v2407 = vadd.f32 %v2066, %v2406
        %v2408 = vpop.f32.mrb[0].mxu0
        %v2409 = vadd.f32 %v2066, %v2408
        %v2410 = vpop.f32.mrb[0].mxu0
        %v2411 = vadd.f32 %v2070, %v2410
        %v2412 = vpop.f32.mrb[0].mxu0
        %v2413 = vadd.f32 %v2070, %v2412
        %2414 = vmatprep.mubr.bf16.mxu0 %v2231
        %2415 = vmatmul.mubr.bf16.gmra.mrb[0].mxu0 %v2230
        %v2416 = vpop.f32.mrb[0].mxu0
        %v2417 = vadd.f32 %v2074, %v2416
        %v2418 = vpop.f32.mrb[0].mxu0
        %v2419 = vadd.f32 %v2074, %v2418
        %v2420 = vpop.f32.mrb[0].mxu0
        %v2421 = vadd.f32 %v2078, %v2420
        %v2422 = vpop.f32.mrb[0].mxu0
        %v2423 = vadd.f32 %v2078, %v2422
        %2424 = vmatprep.mubr.bf16.mxu0 %v2233
        %2425 = vmatmul.mubr.bf16.gmra.mrb[0].mxu0 %v2232
        %v2426 = vpop.f32.mrb[0].mxu0
        %v2427 = vadd.f32 %v2082, %v2426
        %v2428 = vpop.f32.mrb[0].mxu0
        %v2429 = vadd.f32 %v2082, %v2428
        %v2430 = vpop.f32.mrb[0].mxu0
        %v2431 = vadd.f32 %v2086, %v2430
        %v2432 = vpop.f32.mrb[0].mxu0
        %v2433 = vadd.f32 %v2086, %v2432
        %2434 = vmatprep.mubr.bf16.mxu0 %v2235
        %2435 = vmatmul.mubr.bf16.gmra.mrb[0].mxu0 %v2234
        %v2436 = vpop.f32.mrb[0].mxu0
        %v2437 = vadd.f32 %v2090, %v2436
        %v2438 = vpop.f32.mrb[0].mxu0
        %v2439 = vadd.f32 %v2090, %v2438
        %v2440 = vpop.f32.mrb[0].mxu0
        %v2441 = vadd.f32 %v2094, %v2440
        %v2442 = vpop.f32.mrb[0].mxu0
        %v2443 = vadd.f32 %v2094, %v2442
        %2444 = vmatprep.mubr.bf16.mxu0 %v2237
        %2445 = vmatmul.mubr.bf16.gmra.mrb[0].mxu0 %v2236
        %v2446 = vpop.f32.mrb[0].mxu0
        %v2447 = vadd.f32 %v2098, %v2446
        %v2448 = vpop.f32.mrb[0].mxu0
        %v2449 = vadd.f32 %v2098, %v2448
        %v2450 = vpop.f32.mrb[0].mxu0
        %v2451 = vadd.f32 %v2102, %v2450
        %v2452 = vpop.f32.mrb[0].mxu0
        %v2453 = vadd.f32 %v2102, %v2452
        %2454 = vmatprep.mubr.bf16.mxu0 %v2239
        %2455 = vmatmul.mubr.bf16.gmra.mrb[0].mxu0 %v2238
        %v2456 = vpop.f32.mrb[0].mxu0
        %v2457 = vadd.f32 %v2106, %v2456
        %v2458 = vpop.f32.mrb[0].mxu0
        %v2459 = vadd.f32 %v2106, %v2458
        %v2460 = vpop.f32.mrb[0].mxu0
        %v2461 = vadd.f32 %v2110, %v2460
        %v2462 = vpop.f32.mrb[0].mxu0
        %v2463 = vadd.f32 %v2110, %v2462
        %2464 = vdwg.mxu0
        %v2465 = vtanh.pop %v2307
        %v2466 = vtanh.pop %v2309
        %v2467 = vtanh.pop %v2311
        %v2468 = vtanh.pop %v2313
        %v2469 = vtanh.pop %v2317
        %v2470 = vtanh.pop %v2319
        %v2471 = vtanh.pop %v2321
        %v2472 = vtanh.pop %v2323
        %v2473 = vtanh.pop %v2327
        %v2474 = vtanh.pop %v2329
        %v2475 = vtanh.pop %v2331
        %v2476 = vtanh.pop %v2333
        %v2477 = vtanh.pop %v2337
        %v2478 = vtanh.pop %v2339
        %v2479 = vtanh.pop %v2341
        %v2480 = vtanh.pop %v2343
        %v2481 = vtanh.pop %v2347
        %v2482 = vtanh.pop %v2349
        %v2483 = vtanh.pop %v2351
        %v2484 = vtanh.pop %v2353
        %v2485 = vtanh.pop %v2357
        %v2486 = vtanh.pop %v2359
        %v2487 = vtanh.pop %v2361
        %v2488 = vtanh.pop %v2363
        %v2489 = vtanh.pop %v2367
        %v2490 = vtanh.pop %v2369
        %v2491 = vtanh.pop %v2371
        %v2492 = vtanh.pop %v2373
        %v2493 = vtanh.pop %v2377
        %v2494 = vtanh.pop %v2379
        %v2495 = vtanh.pop %v2381
        %v2496 = vtanh.pop %v2383
        %v2497 = vadd.f32 %v2465, %v1855
        %v2498 = vadd.f32 %v2466, %v1856
        %v2499 = vadd.f32 %v2467, %v1857
        %v2500 = vadd.f32 %v2468, %v1858
        %v2501 = vadd.f32 %v2469, %v1859
        %v2502 = vadd.f32 %v2470, %v1860
        %v2503 = vadd.f32 %v2471, %v1861
        %v2504 = vadd.f32 %v2472, %v1862
        %v2505 = vadd.f32 %v2473, %v1863
        %v2506 = vadd.f32 %v2474, %v1864
        %v2507 = vadd.f32 %v2475, %v1865
        %v2508 = vadd.f32 %v2476, %v1866
        %v2509 = vadd.f32 %v2477, %v1867
        %v2510 = vadd.f32 %v2478, %v1868
        %v2511 = vadd.f32 %v2479, %v1869
        %v2512 = vadd.f32 %v2480, %v1870
        %v2513 = vadd.f32 %v2481, %v1871
        %v2514 = vadd.f32 %v2482, %v1872
        %v2515 = vadd.f32 %v2483, %v1873
        %v2516 = vadd.f32 %v2484, %v1874
        %v2517 = vadd.f32 %v2485, %v1875
        %v2518 = vadd.f32 %v2486, %v1876
        %v2519 = vadd.f32 %v2487, %v1877
        %v2520 = vadd.f32 %v2488, %v1878
        %v2521 = vadd.f32 %v2489, %v1879
        %v2522 = vadd.f32 %v2490, %v1880
        %v2523 = vadd.f32 %v2491, %v1881
        %v2524 = vadd.f32 %v2492, %v1882
        %v2525 = vadd.f32 %v2493, %v1883
        %v2526 = vadd.f32 %v2494, %v1884
        %v2527 = vadd.f32 %v2495, %v1885
        %v2528 = vadd.f32 %v2496, %v1886
        %v2529 = vmax.f32 %v2387, 0.0
        %v2530 = vmax.f32 %v2389, 0.0
        %v2531 = vmax.f32 %v2391, 0.0
        %v2532 = vmax.f32 %v2393, 0.0
        %v2533 = vmax.f32 %v2397, 0.0
        %v2534 = vmax.f32 %v2399, 0.0
        %v2535 = vmax.f32 %v2401, 0.0
        %v2536 = vmax.f32 %v2403, 0.0
        %v2537 = vmax.f32 %v2407, 0.0
        %v2538 = vmax.f32 %v2409, 0.0
        %v2539 = vmax.f32 %v2411, 0.0
        %v2540 = vmax.f32 %v2413, 0.0
        %v2541 = vmax.f32 %v2417, 0.0
        %v2542 = vmax.f32 %v2419, 0.0
        %v2543 = vmax.f32 %v2421, 0.0
        %v2544 = vmax.f32 %v2423, 0.0
        %v2545 = vmax.f32 %v2427, 0.0
        %v2546 = vmax.f32 %v2429, 0.0
        %v2547 = vmax.f32 %v2431, 0.0
        %v2548 = vmax.f32 %v2433, 0.0
        %v2549 = vmax.f32 %v2437, 0.0
        %v2550 = vmax.f32 %v2439, 0.0
        %v2551 = vmax.f32 %v2441, 0.0
        %v2552 = vmax.f32 %v2443, 0.0
        %v2553 = vmax.f32 %v2447, 0.0
        %v2554 = vmax.f32 %v2449, 0.0
        %v2555 = vmax.f32 %v2451, 0.0
        %v2556 = vmax.f32 %v2453, 0.0
        %v2557 = vmax.f32 %v2457, 0.0
        %v2558 = vmax.f32 %v2459, 0.0
        %v2559 = vmax.f32 %v2461, 0.0
        %v2560 = vmax.f32 %v2463, 0.0
        %v2561 = vld [vmem:[#allocation2] sm:$0xff]
        %v2562 = vld [vmem:[#allocation2 + $0x8] sm:$0xff]
        %v2563 = vld [vmem:[#allocation2 + $0x10] sm:$0xff]
        %v2564 = vld [vmem:[#allocation2 + $0x18] sm:$0xff]
        %v2565 = vld [vmem:[#allocation2 + $0x20] sm:$0xff]
        %v2566 = vld [vmem:[#allocation2 + $0x28] sm:$0xff]
        %v2567 = vld [vmem:[#allocation2 + $0x30] sm:$0xff]
        %v2568 = vld [vmem:[#allocation2 + $0x38] sm:$0xff]
        %v2569 = vld [vmem:[#allocation2 + $0x40] sm:$0xff]
        %v2570 = vld [vmem:[#allocation2 + $0x48] sm:$0xff]
        %v2571 = vld [vmem:[#allocation2 + $0x50] sm:$0xff]
        %v2572 = vld [vmem:[#allocation2 + $0x58] sm:$0xff]
        %v2573 = vld [vmem:[#allocation2 + $0x60] sm:$0xff]
        %v2574 = vld [vmem:[#allocation2 + $0x68] sm:$0xff]
        %v2575 = vld [vmem:[#allocation2 + $0x70] sm:$0xff]
        %v2576 = vld [vmem:[#allocation2 + $0x78] sm:$0xff]
        %v2577 = vpack.c.bf16 %v2499, %v2497
        %v2578 = vpack.c.bf16 %v2500, %v2498
        %v2579 = vpack.c.bf16 %v2503, %v2501
        %v2580 = vpack.c.bf16 %v2504, %v2502
        %v2581 = vpack.c.bf16 %v2507, %v2505
        %v2582 = vpack.c.bf16 %v2508, %v2506
        %v2583 = vpack.c.bf16 %v2511, %v2509
        %v2584 = vpack.c.bf16 %v2512, %v2510
        %v2585 = vpack.c.bf16 %v2515, %v2513
        %v2586 = vpack.c.bf16 %v2516, %v2514
        %v2587 = vpack.c.bf16 %v2519, %v2517
        %v2588 = vpack.c.bf16 %v2520, %v2518
        %v2589 = vpack.c.bf16 %v2523, %v2521
        %v2590 = vpack.c.bf16 %v2524, %v2522
        %v2591 = vpack.c.bf16 %v2527, %v2525
        %v2592 = vpack.c.bf16 %v2528, %v2526
        %v2593 = vpack.c.bf16 %v2531, %v2529
        %v2594 = vpack.c.bf16 %v2532, %v2530
        %v2595 = vpack.c.bf16 %v2535, %v2533
        %v2596 = vpack.c.bf16 %v2536, %v2534
        %v2597 = vpack.c.bf16 %v2539, %v2537
        %v2598 = vpack.c.bf16 %v2540, %v2538
        %v2599 = vpack.c.bf16 %v2543, %v2541
        %v2600 = vpack.c.bf16 %v2544, %v2542
        %v2601 = vpack.c.bf16 %v2547, %v2545
        %v2602 = vpack.c.bf16 %v2548, %v2546
        %v2603 = vpack.c.bf16 %v2551, %v2549
        %v2604 = vpack.c.bf16 %v2552, %v2550
        %v2605 = vpack.c.bf16 %v2555, %v2553
        %v2606 = vpack.c.bf16 %v2556, %v2554
        %v2607 = vpack.c.bf16 %v2559, %v2557
        %v2608 = vpack.c.bf16 %v2560, %v2558
        %2609 = vset.pattern.permute.xlu0 8
        %2610 = vperm.xlu0 %2609, %v238
        %v2611 = vpop.permute.xlu0 %2610
        %2613 = vset.pattern.permute.xlu0 8
        %2614 = vperm.xlu0 %2613, %v239
        %v2615 = vpop.permute.xlu0 %2614
        %2617 = vset.pattern.permute.xlu0 8
        %2618 = vperm.xlu0 %2617, %v240
        %v2619 = vpop.permute.xlu0 %2618
        %2621 = vset.pattern.permute.xlu0 8
        %2622 = vperm.xlu0 %2621, %v241
        %v2623 = vpop.permute.xlu0 %2622
        %2625 = vset.pattern.permute.xlu0 8
        %2626 = vperm.xlu0 %2625, %v242
        %v2627 = vpop.permute.xlu0 %2626
        %2629 = vset.pattern.permute.xlu0 8
        %2630 = vperm.xlu0 %2629, %v243
        %v2631 = vpop.permute.xlu0 %2630
        %2633 = vset.pattern.permute.xlu0 8
        %2634 = vperm.xlu0 %2633, %v244
        %v2635 = vpop.permute.xlu0 %2634
        %2637 = vset.pattern.permute.xlu0 8
        %2638 = vperm.xlu0 %2637, %v245
        %v2639 = vpop.permute.xlu0 %2638
        %2641 = vset.pattern.permute.xlu0 8
        %2642 = vperm.xlu0 %2641, %v246
        %v2643 = vpop.permute.xlu0 %2642
        %2645 = vset.pattern.permute.xlu0 8
        %2646 = vperm.xlu0 %2645, %v247
        %v2647 = vpop.permute.xlu0 %2646
        %2649 = vset.pattern.permute.xlu0 8
        %2650 = vperm.xlu0 %2649, %v248
        %v2651 = vpop.permute.xlu0 %2650
        %2653 = vset.pattern.permute.xlu0 8
        %2654 = vperm.xlu0 %2653, %v249
        %v2655 = vpop.permute.xlu0 %2654
        %2657 = vset.pattern.permute.xlu0 8
        %2658 = vperm.xlu0 %2657, %v250
        %v2659 = vpop.permute.xlu0 %2658
        %2661 = vset.pattern.permute.xlu0 8
        %2662 = vperm.xlu0 %2661, %v251
        %v2663 = vpop.permute.xlu0 %2662
        %2665 = vset.pattern.permute.xlu0 8
        %2666 = vperm.xlu0 %2665, %v252
        %v2667 = vpop.permute.xlu0 %2666
        %2669 = vset.pattern.permute.xlu0 8
        %2670 = vperm.xlu0 %2669, %v253
        %v2671 = vpop.permute.xlu0 %2670
        %v2689 = vunpack.c.l.b16 %v2561
        %v2690 = vunpack.c.h.b16 %v2561
        %v2691 = vunpack.c.l.b16 %v2562
        %v2692 = vunpack.c.h.b16 %v2562
        %v2693 = vunpack.c.l.b16 %v2563
        %v2694 = vunpack.c.h.b16 %v2563
        %v2695 = vunpack.c.l.b16 %v2564
        %v2696 = vunpack.c.h.b16 %v2564
        %v2697 = vunpack.c.l.b16 %v2565
        %v2698 = vunpack.c.h.b16 %v2565
        %v2699 = vunpack.c.l.b16 %v2566
        %v2700 = vunpack.c.h.b16 %v2566
        %v2701 = vunpack.c.l.b16 %v2567
        %v2702 = vunpack.c.h.b16 %v2567
        %v2703 = vunpack.c.l.b16 %v2568
        %v2704 = vunpack.c.h.b16 %v2568
        %v2705 = vunpack.c.l.b16 %v2569
        %v2706 = vunpack.c.h.b16 %v2569
        %v2707 = vunpack.c.l.b16 %v2570
        %v2708 = vunpack.c.h.b16 %v2570
        %v2709 = vunpack.c.l.b16 %v2571
        %v2710 = vunpack.c.h.b16 %v2571
        %v2711 = vunpack.c.l.b16 %v2572
        %v2712 = vunpack.c.h.b16 %v2572
        %v2713 = vunpack.c.l.b16 %v2573
        %v2714 = vunpack.c.h.b16 %v2573
        %v2715 = vunpack.c.l.b16 %v2574
        %v2716 = vunpack.c.h.b16 %v2574
        %v2717 = vunpack.c.l.b16 %v2575
        %v2718 = vunpack.c.h.b16 %v2575
        %v2719 = vunpack.c.l.b16 %v2576
        %v2720 = vunpack.c.h.b16 %v2576
        %v2721 = vpack.c.b16 %v2691, %v2689
        %v2722 = vpack.c.b16 %v2692, %v2690
        %v2723 = vpack.c.b16 %v2695, %v2693
        %v2724 = vpack.c.b16 %v2696, %v2694
        %v2725 = vpack.c.b16 %v2699, %v2697
        %v2726 = vpack.c.b16 %v2700, %v2698
        %v2727 = vpack.c.b16 %v2703, %v2701
        %v2728 = vpack.c.b16 %v2704, %v2702
        %v2729 = vpack.c.b16 %v2707, %v2705
        %v2730 = vpack.c.b16 %v2708, %v2706
        %v2731 = vpack.c.b16 %v2711, %v2709
        %v2732 = vpack.c.b16 %v2712, %v2710
        %v2733 = vpack.c.b16 %v2715, %v2713
        %v2734 = vpack.c.b16 %v2716, %v2714
        %v2735 = vpack.c.b16 %v2719, %v2717
        %v2736 = vpack.c.b16 %v2720, %v2718
        %2753 = vmatprep.subr.bf16.mxu0 %v2578
        %2754 = vmatpush1.bf16.msra.mxu0 %v2577
        %2755 = vmatprep.subr.bf16.mxu0 %v2580
        %2756 = vmatpush1.bf16.msra.mxu0 %v2579
        %2757 = vmatprep.subr.bf16.mxu0 %v2582
        %2758 = vmatpush1.bf16.msra.mxu0 %v2581
        %2759 = vmatprep.subr.bf16.mxu0 %v2584
        %2760 = vmatpush1.bf16.msra.mxu0 %v2583
        %2761 = vmatprep.subr.bf16.mxu0 %v2586
        %2762 = vmatpush1.bf16.msra.mxu0 %v2585
        %2763 = vmatprep.subr.bf16.mxu0 %v2588
        %2764 = vmatpush1.bf16.msra.mxu0 %v2587
        %2765 = vmatprep.subr.bf16.mxu0 %v2590
        %2766 = vmatpush1.bf16.msra.mxu0 %v2589
        %2767 = vmatprep.subr.bf16.mxu0 %v2592
        %2768 = vmatpush1.bf16.msra.mxu0 %v2591
        %2769 = vmatprep.subr.bf16.mxu0 %v2594
        %2770 = vmatpush1.bf16.msra.mxu0 %v2593
        %2771 = vmatprep.subr.bf16.mxu0 %v2596
        %2772 = vmatpush1.bf16.msra.mxu0 %v2595
        %2773 = vmatprep.subr.bf16.mxu0 %v2598
        %2774 = vmatpush1.bf16.msra.mxu0 %v2597
        %2775 = vmatprep.subr.bf16.mxu0 %v2600
        %2776 = vmatpush1.bf16.msra.mxu0 %v2599
        %2777 = vmatprep.subr.bf16.mxu0 %v2602
        %2778 = vmatpush1.bf16.msra.mxu0 %v2601
        %2779 = vmatprep.subr.bf16.mxu0 %v2604
        %2780 = vmatpush1.bf16.msra.mxu0 %v2603
        %2781 = vmatprep.subr.bf16.mxu0 %v2606
        %2782 = vmatpush1.bf16.msra.mxu0 %v2605
        %2783 = vmatprep.subr.bf16.mxu0 %v2608
        %2784 = vmatpush1.bf16.msra.mxu0 %v2607
        %2785 = vmatprep.mubr.bf16.mxu0 %v2722
        %2786 = vmatmul.mubr.bf16.gmra.mrb[0].mxu0 %v2721
        %v2787 = vpop.f32.mrb[0].mxu0
        %v2788 = vadd.f32 %v2611, %v2787
        %v2789 = vpop.f32.mrb[0].mxu0
        %v2790 = vadd.f32 %v2611, %v2789
        %v2791 = vpop.f32.mrb[0].mxu0
        %v2792 = vadd.f32 %v2615, %v2791
        %v2793 = vpop.f32.mrb[0].mxu0
        %v2794 = vadd.f32 %v2615, %v2793
        %2795 = vmatprep.mubr.bf16.mxu0 %v2724
        %2796 = vmatmul.mubr.bf16.gmra.mrb[0].mxu0 %v2723
        %v2797 = vpop.f32.mrb[0].mxu0
        %v2798 = vadd.f32 %v2619, %v2797
        %v2799 = vpop.f32.mrb[0].mxu0
        %v2800 = vadd.f32 %v2619, %v2799
        %v2801 = vpop.f32.mrb[0].mxu0
        %v2802 = vadd.f32 %v2623, %v2801
        %v2803 = vpop.f32.mrb[0].mxu0
        %v2804 = vadd.f32 %v2623, %v2803
        %2805 = vmatprep.mubr.bf16.mxu0 %v2726
        %2806 = vmatmul.mubr.bf16.gmra.mrb[0].mxu0 %v2725
        %v2807 = vpop.f32.mrb[0].mxu0
        %v2808 = vadd.f32 %v2627, %v2807
        %v2809 = vpop.f32.mrb[0].mxu0
        %v2810 = vadd.f32 %v2627, %v2809
        %v2811 = vpop.f32.mrb[0].mxu0
        %v2812 = vadd.f32 %v2631, %v2811
        %v2813 = vpop.f32.mrb[0].mxu0
        %v2814 = vadd.f32 %v2631, %v2813
        %2815 = vmatprep.mubr.bf16.mxu0 %v2728
        %2816 = vmatmul.mubr.bf16.gmra.mrb[0].mxu0 %v2727
        %v2817 = vpop.f32.mrb[0].mxu0
        %v2818 = vadd.f32 %v2635, %v2817
        %v2819 = vpop.f32.mrb[0].mxu0
        %v2820 = vadd.f32 %v2635, %v2819
        %v2821 = vpop.f32.mrb[0].mxu0
        %v2822 = vadd.f32 %v2639, %v2821
        %v2823 = vpop.f32.mrb[0].mxu0
        %v2824 = vadd.f32 %v2639, %v2823
        %2825 = vmatprep.mubr.bf16.mxu0 %v2730
        %2826 = vmatmul.mubr.bf16.gmra.mrb[0].mxu0 %v2729
        %v2827 = vpop.f32.mrb[0].mxu0
        %v2828 = vadd.f32 %v2643, %v2827
        %v2829 = vpop.f32.mrb[0].mxu0
        %v2830 = vadd.f32 %v2643, %v2829
        %v2831 = vpop.f32.mrb[0].mxu0
        %v2832 = vadd.f32 %v2647, %v2831
        %v2833 = vpop.f32.mrb[0].mxu0
        %v2834 = vadd.f32 %v2647, %v2833
        %2835 = vmatprep.mubr.bf16.mxu0 %v2732
        %2836 = vmatmul.mubr.bf16.gmra.mrb[0].mxu0 %v2731
        %v2837 = vpop.f32.mrb[0].mxu0
        %v2838 = vadd.f32 %v2651, %v2837
        %v2839 = vpop.f32.mrb[0].mxu0
        %v2840 = vadd.f32 %v2651, %v2839
        %v2841 = vpop.f32.mrb[0].mxu0
        %v2842 = vadd.f32 %v2655, %v2841
        %v2843 = vpop.f32.mrb[0].mxu0
        %v2844 = vadd.f32 %v2655, %v2843
        %2845 = vmatprep.mubr.bf16.mxu0 %v2734
        %2846 = vmatmul.mubr.bf16.gmra.mrb[0].mxu0 %v2733
        %v2847 = vpop.f32.mrb[0].mxu0
        %v2848 = vadd.f32 %v2659, %v2847
        %v2849 = vpop.f32.mrb[0].mxu0
        %v2850 = vadd.f32 %v2659, %v2849
        %v2851 = vpop.f32.mrb[0].mxu0
        %v2852 = vadd.f32 %v2663, %v2851
        %v2853 = vpop.f32.mrb[0].mxu0
        %v2854 = vadd.f32 %v2663, %v2853
        %2855 = vmatprep.mubr.bf16.mxu0 %v2736
        %2856 = vmatmul.mubr.bf16.gmra.mrb[0].mxu0 %v2735
        %v2857 = vpop.f32.mrb[0].mxu0
        %v2858 = vadd.f32 %v2667, %v2857
        %v2859 = vpop.f32.mrb[0].mxu0
        %v2860 = vadd.f32 %v2667, %v2859
        %v2861 = vpop.f32.mrb[0].mxu0
        %v2862 = vadd.f32 %v2671, %v2861
        %v2863 = vpop.f32.mrb[0].mxu0
        %v2864 = vadd.f32 %v2671, %v2863
        %2865 = vdwg.mxu0
        %v2866 = vtanh.pop %v2788
        %v2867 = vtanh.pop %v2790
        %v2868 = vtanh.pop %v2792
        %v2869 = vtanh.pop %v2794
        %v2870 = vtanh.pop %v2798
        %v2871 = vtanh.pop %v2800
        %v2872 = vtanh.pop %v2802
        %v2873 = vtanh.pop %v2804
        %v2874 = vtanh.pop %v2808
        %v2875 = vtanh.pop %v2810
        %v2876 = vtanh.pop %v2812
        %v2877 = vtanh.pop %v2814
        %v2878 = vtanh.pop %v2818
        %v2879 = vtanh.pop %v2820
        %v2880 = vtanh.pop %v2822
        %v2881 = vtanh.pop %v2824
        %v2882 = vtanh.pop %v2828
        %v2883 = vtanh.pop %v2830
        %v2884 = vtanh.pop %v2832
        %v2885 = vtanh.pop %v2834
        %v2886 = vtanh.pop %v2838
        %v2887 = vtanh.pop %v2840
        %v2888 = vtanh.pop %v2842
        %v2889 = vtanh.pop %v2844
        %v2890 = vtanh.pop %v2848
        %v2891 = vtanh.pop %v2850
        %v2892 = vtanh.pop %v2852
        %v2893 = vtanh.pop %v2854
        %v2894 = vtanh.pop %v2858
        %v2895 = vtanh.pop %v2860
        %v2896 = vtanh.pop %v2862
        %v2897 = vtanh.pop %v2864
        %2898 = vset.pattern.permute.xlu0 9
        %2899 = vperm.xlu0 %2898, %v238
        %v2900 = vpop.permute.xlu0 %2899
        %2902 = vset.pattern.permute.xlu0 9
        %2903 = vperm.xlu0 %2902, %v239
        %v2904 = vpop.permute.xlu0 %2903
        %2906 = vset.pattern.permute.xlu0 9
        %2907 = vperm.xlu0 %2906, %v240
        %v2908 = vpop.permute.xlu0 %2907
        %2910 = vset.pattern.permute.xlu0 9
        %2911 = vperm.xlu0 %2910, %v241
        %v2912 = vpop.permute.xlu0 %2911
        %2914 = vset.pattern.permute.xlu0 9
        %2915 = vperm.xlu0 %2914, %v242
        %v2916 = vpop.permute.xlu0 %2915
        %2918 = vset.pattern.permute.xlu0 9
        %2919 = vperm.xlu0 %2918, %v243
        %v2920 = vpop.permute.xlu0 %2919
        %2922 = vset.pattern.permute.xlu0 9
        %2923 = vperm.xlu0 %2922, %v244
        %v2924 = vpop.permute.xlu0 %2923
        %2926 = vset.pattern.permute.xlu0 9
        %2927 = vperm.xlu0 %2926, %v245
        %v2928 = vpop.permute.xlu0 %2927
        %2930 = vset.pattern.permute.xlu0 9
        %2931 = vperm.xlu0 %2930, %v246
        %v2932 = vpop.permute.xlu0 %2931
        %2934 = vset.pattern.permute.xlu0 9
        %2935 = vperm.xlu0 %2934, %v247
        %v2936 = vpop.permute.xlu0 %2935
        %2938 = vset.pattern.permute.xlu0 9
        %2939 = vperm.xlu0 %2938, %v248
        %v2940 = vpop.permute.xlu0 %2939
        %2942 = vset.pattern.permute.xlu0 9
        %2943 = vperm.xlu0 %2942, %v249
        %v2944 = vpop.permute.xlu0 %2943
        %2946 = vset.pattern.permute.xlu0 9
        %2947 = vperm.xlu0 %2946, %v250
        %v2948 = vpop.permute.xlu0 %2947
        %2950 = vset.pattern.permute.xlu0 9
        %2951 = vperm.xlu0 %2950, %v251
        %v2952 = vpop.permute.xlu0 %2951
        %2954 = vset.pattern.permute.xlu0 9
        %2955 = vperm.xlu0 %2954, %v252
        %v2956 = vpop.permute.xlu0 %2955
        %2958 = vset.pattern.permute.xlu0 9
        %2959 = vperm.xlu0 %2958, %v253
        %v2960 = vpop.permute.xlu0 %2959
        %v2962 = vmul.f32 %v2866, %v2900
        %v2963 = vmul.f32 %v2867, %v2900
        %v2964 = vmul.f32 %v2868, %v2904
        %v2965 = vmul.f32 %v2869, %v2904
        %v2966 = vmul.f32 %v2870, %v2908
        %v2967 = vmul.f32 %v2871, %v2908
        %v2968 = vmul.f32 %v2872, %v2912
        %v2969 = vmul.f32 %v2873, %v2912
        %v2970 = vmul.f32 %v2874, %v2916
        %v2971 = vmul.f32 %v2875, %v2916
        %v2972 = vmul.f32 %v2876, %v2920
        %v2973 = vmul.f32 %v2877, %v2920
        %v2974 = vmul.f32 %v2878, %v2924
        %v2975 = vmul.f32 %v2879, %v2924
        %v2976 = vmul.f32 %v2880, %v2928
        %v2977 = vmul.f32 %v2881, %v2928
        %v2978 = vmul.f32 %v2882, %v2932
        %v2979 = vmul.f32 %v2883, %v2932
        %v2980 = vmul.f32 %v2884, %v2936
        %v2981 = vmul.f32 %v2885, %v2936
        %v2982 = vmul.f32 %v2886, %v2940
        %v2983 = vmul.f32 %v2887, %v2940
        %v2984 = vmul.f32 %v2888, %v2944
        %v2985 = vmul.f32 %v2889, %v2944
        %v2986 = vmul.f32 %v2890, %v2948
        %v2987 = vmul.f32 %v2891, %v2948
        %v2988 = vmul.f32 %v2892, %v2952
        %v2989 = vmul.f32 %v2893, %v2952
        %v2990 = vmul.f32 %v2894, %v2956
        %v2991 = vmul.f32 %v2895, %v2956
        %v2992 = vmul.f32 %v2896, %v2960
        %v2993 = vmul.f32 %v2897, %v2960
        %v2994 = vadd.f32 %v2962, %v2964
        %v2995 = vadd.f32 %v2994, %v2966
        %v2996 = vadd.f32 %v2995, %v2968
        %v2997 = vadd.f32 %v2996, %v2970
        %v2998 = vadd.f32 %v2997, %v2972
        %v2999 = vadd.f32 %v2998, %v2974
        %v3000 = vadd.f32 %v2999, %v2976
        %v3001 = vadd.f32 %v3000, %v2978
        %v3002 = vadd.f32 %v3001, %v2980
        %v3003 = vadd.f32 %v3002, %v2982
        %v3004 = vadd.f32 %v3003, %v2984
        %v3005 = vadd.f32 %v3004, %v2986
        %v3006 = vadd.f32 %v3005, %v2988
        %v3007 = vadd.f32 %v3006, %v2990
        %v3008 = vadd.f32 %v3007, %v2992
        %v3009 = vrot.slane %v3008, 4
        %v3010 = vadd.f32 %v3008, %v3009
        %v3011 = vrot.slane %v3010, 2
        %v3012 = vadd.f32 %v3010, %v3011
        %v3013 = vrot.slane %v3012, 1
        %v3014 = vadd.f32 %v3012, %v3013
        %v3015 = vadd.f32 %v2963, %v2965
        %v3016 = vadd.f32 %v3015, %v2967
        %v3017 = vadd.f32 %v3016, %v2969
        %v3018 = vadd.f32 %v3017, %v2971
        %v3019 = vadd.f32 %v3018, %v2973
        %v3020 = vadd.f32 %v3019, %v2975
        %v3021 = vadd.f32 %v3020, %v2977
        %v3022 = vadd.f32 %v3021, %v2979
        %v3023 = vadd.f32 %v3022, %v2981
        %v3024 = vadd.f32 %v3023, %v2983
        %v3025 = vadd.f32 %v3024, %v2985
        %v3026 = vadd.f32 %v3025, %v2987
        %v3027 = vadd.f32 %v3026, %v2989
        %v3028 = vadd.f32 %v3027, %v2991
        %v3029 = vadd.f32 %v3028, %v2993
        %v3030 = vrot.slane %v3029, 4
        %v3031 = vadd.f32 %v3029, %v3030
        %v3032 = vrot.slane %v3031, 2
        %v3033 = vadd.f32 %v3031, %v3032
        %v3034 = vrot.slane %v3033, 1
        %v3035 = vadd.f32 %v3033, %v3034
        %3036 = vset.pattern.permute.xlu0 10
        %3037 = vperm.xlu0 %3036, %v238
        %v3038 = vpop.permute.xlu0 %3037
        %v3040 = vadd.f32 %v3014, %v3038
        %v3041 = vadd.f32 %v3035, %v3038
        %v3042 = vadd.f32 %v3040, 1.0
        %v3043 = vadd.f32 %v3041, 1.0
        %v3044 = vmul.f32 %v3042, 1.442695
        %v3045 = vpow.pop %v3044
        %v3046 = vmul.f32 %v3043, 1.442695
        %v3047 = vpow.pop %v3046
        %v3048 = vsub.f32 %v3045, 4.0
        %v3049 = vsub.f32 %v3047, 4.0
        %v3050 = vsub.f32 %v3048, 2.7182817
        %v3051 = vsub.f32 %v3049, 2.7182817
        %v3052 = vmax.f32 %v3050, -4.0
        %v3053 = vmax.f32 %v3051, -4.0
        %v3054 = vmin.f32 %v3052, -1.0
        %v3055 = vmin.f32 %v3053, -1.0
        %v3058 = vcombine.low %v3054, %v3055
        %v3060 = vunpack.c.l.s4 1966171168
        %v3061 = vunpack.c.0.s8 %v3060
        %v3062 = vlaneseq
        %v3063 = vshrl.u32 %v3062, 7
        %v3064 = vsub.s32 %v3061, %v3063
        %v3065 = vrot.slane %v3058, %v3064
        %v3067 = vunpack.c.l.s4 1966171168
        %v3068 = vunpack.c.0.s8 %v3067
        %v3069 = vlaneseq
        %v3070 = vshrl.u32 %v3069, 7
        %v3071 = vsub.s32 %v3068, %v3070
        %v3072 = vrot.slane %v3065, %v3071
        %v3074 = vlaneseq
        %vm3075 = vcmp.ge.s32.totalorder %v3074, 0
        %vm3076 = vcmp.lt.s32.totalorder %v3074, 256
        %vm3077 = vmand %vm3075, %vm3076
        %3078 = vst.msk [vmem:[%s218] sm:$0x3] %vm3077, %v3072
        %s3079 = sand.u32 %s116, 1
        %s3080 = scalar_lea.sflag [#allocation4], %s3079
        %s3081 = sand.u32 %s116, 1
        %s3082 = smul.addr %s3081, 2
        %s3083 = scalar_lea.vmem [#allocation5], %s3082
        // Predicated region
        $region41: #{tpu_custom_call.1} parent=35 // pred_check
          %p3084 = pneg %p126
        $region42: #{tpu_custom_call.1} parent=35 // pred_check_branch
          %3086 = sbr.rel (%p3084) target = $region44
        $region43: #{tpu_custom_call.1} parent=35 // pred_region
          %s3087 = smul.u32 2, %s19
          %s3088 = ssub.s32 3, %s3087
          %p3089 = scmp.lt.s32.totalorder %s3088, 2
          %s3090 = scalar_select %p3089, %s3088, 2
          %s3091 = smul.u32 16, %s3090
          %s3093 = ssub.s32 32, %s3091
          %3094 = vsyncadd %s3080, %s3093
          %p3095 = scmp.ne.s32.totalorder 0, %s3091
          %s3096 = smul.addr %s3087, 16
          %s3097 = scalar_lea.hbm %s4, %s3096
          %s3098 = sshll.u32 %s3090, 4
          %s3099 = sshll.u32 %s3083, 4
          %s3100 = int_to_ptr.vmem [resolvable:$true] %s3099
          %3102 = dma.vmem_to_hbm [thread:$0]  (%p3095), %s3100, %s3098, %s3097, %s3080
        $region44: #{tpu_custom_call.1} parent=35 // pred_fallthru
          _
      $region36: #{tpu_custom_call.1} parent=5 // pred_fallthru
        _
      %p3103 = scmp.le.s32.totalorder 2, %s14
      // Predicated region
      $region45: #{tpu_custom_call.1} parent=5 // pred_check
        %p3104 = pneg %p3103
      $region46: #{tpu_custom_call.1} parent=5 // pred_check_branch
        %3106 = sbr.rel (%p3104) target = $region48
      $region47: #{tpu_custom_call.1} parent=5 // pred_region
        %s3107 = ssub.s32 %s14, 2
        // Predicated region
        $region49: #{tpu_custom_call.1} parent=47 // pred_check
          %p3108 = pneg %p132
        $region50: #{tpu_custom_call.1} parent=47 // pred_check_branch
          %3110 = sbr.rel (%p3108) target = $region52
        $region51: #{tpu_custom_call.1} parent=47 // pred_region
          %s3111 = sand.u32 %s117, 1
          %s3112 = scalar_lea.sflag [#allocation4], %s3111
          %s3113 = sand.u32 %s117, 1
          %s3114 = smul.addr %s3113, 2
          %s3115 = scalar_lea.vmem [#allocation5], %s3114
          %3116 = dma.done %s3112, 32
        $region52: #{tpu_custom_call.1} parent=47 // pred_fallthru
          _
      $region48: #{tpu_custom_call.1} parent=5 // pred_fallthru
        _
    $region6: #{tpu_custom_call.1} parent=1 // loop_footer
      %s18 = sadd.s32 1, %s14
    $region7: #{tpu_custom_call.1} parent=1 // loop_footer_branch
      %13 = sbr.rel target = $region3
    $region8: #{tpu_custom_call.1} parent=1 // loop_exit
      _
    %3117 = vsyncpa [#allocation3], 1
    %s3118 = scalar_lea.sflag [#allocation3], 1
    %3119 = vsyncpa %s3118, 1
    %3120 = vsyncpa [#allocation4], 1
    %s3121 = scalar_lea.sflag [#allocation4], 1
    %3122 = vsyncpa %s3121, 1

</llo_original>
